<compile_context>
chip_gen: v5e
topology: v5e:2x2
jax: 0.10.0
libtpu: 0.0.40
codegen_flags: <defaults>
</compile_context>

<pallas_src>
import numpy as np
import jax
import jax.numpy as jnp
from jax.experimental import pallas as pl
from jax.experimental.pallas import tpu as pltpu

# ---------------- configuration (small, consistent with the module) ----------
SAMPLE_RATE = 16000
N_FFT = 400
HOP = 160
N_MELS = 64
BASE_FILTERS = 32          # matchbox.base_filters -> GRU input_size
HIDDEN = 32                # hidden_dim
NUM_CLASSES = 10
BATCH = 2
N_SAMPLES = 1600           # -> T = N_SAMPLES // HOP + 1 = 11 frames


# ---------------- mel filterbank (torchaudio HTK, norm=None) -----------------
def make_mel_fb(n_freqs, n_mels, sample_rate, f_min=0.0, f_max=None):
    f_max = f_max or sample_rate / 2.0
    all_freqs = np.linspace(0.0, sample_rate / 2.0, n_freqs)
    m_min = 2595.0 * np.log10(1.0 + f_min / 700.0)
    m_max = 2595.0 * np.log10(1.0 + f_max / 700.0)
    m_pts = np.linspace(m_min, m_max, n_mels + 2)
    f_pts = 700.0 * (10.0 ** (m_pts / 2595.0) - 1.0)
    f_diff = f_pts[1:] - f_pts[:-1]
    slopes = f_pts[None, :] - all_freqs[:, None]
    down = -slopes[:, :-2] / f_diff[:-1]
    up = slopes[:, 2:] / f_diff[1:]
    fb = np.maximum(0.0, np.minimum(down, up))
    return jnp.asarray(fb, dtype=jnp.float32)     # (n_freqs, n_mels)


# ============================ fused Pallas kernel ============================
def fused_kernel(mel_ref,
                 phi_w_ref, phi_b_ref,
                 wih_ref, bih_ref,
                 whh_ref, bhh_ref,
                 proj_w_ref, proj_b_ref,
                 enh_w_ref, enh_b_ref,
                 attn_w_ref, attn_b_ref, attn_v_ref,
                 fc2_w_ref, fc2_b_ref,
                 out_ref):
    B, T, M = mel_ref.shape
    F = wih_ref.shape[0]
    H = whh_ref.shape[0]
    n_el = float(T * M)

    # --- AmplitudeToDB (power, top_db=None) + per-sample mean/std norm -------
    # One pass per sample: sum and sum-of-squares together; unbiased variance
    # via E[x^2] - mean^2 with the n/(n-1) correction; eps outside sqrt (torch).
    xs = []
    for b in range(B):                                        # B = 2, static
        db_b = 10.0 * jnp.log10(jnp.maximum(mel_ref[b], 1e-10))      # (T, M)
        s1 = jnp.sum(db_b, axis=(0, 1), keepdims=True)
        s2 = jnp.sum(db_b * db_b, axis=(0, 1), keepdims=True)
        mean = s1 * (1.0 / n_el)
        var = (s2 * (1.0 / n_el) - mean * mean) * (n_el / (n_el - 1.0))
        std = jnp.sqrt(jnp.maximum(var, 0.0)) + 1e-5
        xs.append((db_b - mean) / std)
    x = jnp.concatenate(xs, axis=0)                           # (B*T, M), batch-major rows

    # --- phi: MatchboxNetSkip stand-in (pointwise residual, fused weights) ---
    # TODO(synk): MatchboxNetSkip source not provided; stand-in is
    #             relu(x@W1+b1) + (x@W2+b2) with W1|W2 concatenated.
    z = jnp.dot(x, phi_w_ref[...], preferred_element_type=jnp.float32) + phi_b_ref[...]
    feat = jnp.maximum(z[:, :F], 0.0) + z[:, F:]              # (B*T, F)

    # --- GRU input gates for ALL rows (B*T) in one matmul ----------------------
    gx = jnp.dot(feat, wih_ref[...], preferred_element_type=jnp.float32) + bih_ref[...]  # (B*T, 3H)
    # hoisted gate lane-splits (3 total, not 3 per step on the serial chain)
    gxr, gxz, gxn = gx[:, :H], gx[:, H:2 * H], gx[:, 2 * H:]

    def step_rows(g, t):
        # rows (b*T + t) for all b -> (B, H); independent of h (off the chain)
        return jnp.concatenate([g[b * T + t: b * T + t + 1, :] for b in range(B)],
                               axis=0)

    # --- GRU recurrence: one batched (B, H) state, fully unrolled over T -----
    whh = whh_ref[...]                                        # (H, 3H) packed r|z|n
    bhh = bhh_ref[...]                                        # (1, 3H)
    h = jnp.zeros((B, H), dtype=jnp.float32)
    hs_steps = []
    for t in range(T):                                        # T = 11, static unroll
        gxt_r = step_rows(gxr, t)
        gxt_z = step_rows(gxz, t)
        gxt_n = step_rows(gxn, t)
        gh = jnp.dot(h, whh, preferred_element_type=jnp.float32) + bhh   # (B, 3H)
        r = jax.nn.sigmoid(gxt_r + gh[:, :H])
        zt = jax.nn.sigmoid(gxt_z + gh[:, H:2 * H])
        nt = jnp.tanh(gxt_n + r * gh[:, 2 * H:])              # b_hn inside r-gate (torch)
        h = (1.0 - zt) * nt + zt * h
        hs_steps.append(h)                                    # kept in vregs, no VMEM scratch

    # Regroup hidden states batch-major: (B*T, H), rows (b, t) — vreg concats only.
    hs = jnp.concatenate(
        [jnp.concatenate([ht[b:b + 1, :] for ht in hs_steps], axis=0)
         for b in range(B)],
        axis=0)

    # --- projection + enhancer + attention pooling + fc2 ----------------------
    p = jnp.dot(hs, proj_w_ref[...], preferred_element_type=jnp.float32) + proj_b_ref[...]
    # TODO(synk): LightConsonantEnhancer undefined; stand-in: x + x*sigmoid(Wx+b)
    g = jax.nn.sigmoid(
        jnp.dot(p, enh_w_ref[...], preferred_element_type=jnp.float32) + enh_b_ref[...])
    e = p + p * g                                             # (B*T, H)
    # TODO(synk): FocusedAttention undefined; stand-in: additive attention pooling
    a = jnp.tanh(jnp.dot(e, attn_w_ref[...], preferred_element_type=jnp.float32)
                 + attn_b_ref[...])                           # (B*T, H)
    # score = <a, v>: VPU multiply + lane reduction (no 1-lane-output MXU dot)
    s = jnp.sum(a * attn_v_ref[...], axis=-1, keepdims=True)  # (B*T, 1)

    ctxs = []
    for b in range(B):                                        # tiny epilogue, static
        s_b = s[b * T:(b + 1) * T, :]                         # (T, 1)
        e_b = e[b * T:(b + 1) * T, :]                         # (T, H)
        w_b = jax.nn.softmax(s_b, axis=0)
        ctxs.append(jnp.sum(e_b * w_b, axis=0, keepdims=True))  # (1, H)
    ctx = jnp.concatenate(ctxs, axis=0)                       # (B, H)

    # dropout(p=0.3) is identity at inference time.
    out_ref[...] = (jnp.dot(ctx, fc2_w_ref[...], preferred_element_type=jnp.float32)
                    + fc2_b_ref[...])                         # (B, C), one lane-dense store


def fused_post_fft(mel, params):
    """mel: (B, T, n_mels) channels-last -> logits (B, num_classes)."""
    B, T, M = mel.shape
    H, F, C = HIDDEN, BASE_FILTERS, NUM_CLASSES

    def full(r, c):
        return pl.BlockSpec((r, c), lambda i: (0, 0))

    in_specs = [
        pl.BlockSpec((B, T, M), lambda i: (0, 0, 0)),   # mel: whole batch, one shot
        full(M, 2 * F), full(1, 2 * F),                 # phi (W1|W2 concatenated)
        full(F, 3 * H), full(1, 3 * H),                 # GRU input->hidden (r|z|n)
        full(H, 3 * H), full(1, 3 * H),                 # GRU hidden->hidden (r|z|n)
        full(H, H), full(1, H),                         # projection
        full(H, H), full(1, H),                         # consonant enhancer
        full(H, H), full(1, H), full(1, H),             # focused attention (v as row)
        full(H, C), full(1, C),                         # fc2
    ]

    # Single-invocation kernel: total working set is ~50 KB, so VMEM/DMA and
    # pipelining are non-issues on every TPU generation; the win is collapsing
    # B serial GRU chains into one batched chain.
    return pl.pallas_call(
        fused_kernel,
        out_shape=jax.ShapeDtypeStruct((B, C), jnp.float32),
        grid_spec=pltpu.PrefetchScalarGridSpec(
            num_scalar_prefetch=0,
            grid=(1,),
            in_specs=in_specs,
            out_specs=pl.BlockSpec((B, C), lambda i: (0, 0)),
        ),
        compiler_params=pltpu.CompilerParams(dimension_semantics=("arbitrary",)),
    )(mel,
      params["phi_w"], params["phi_b"],
      params["gru_wih_t"], params["gru_bih"],
      params["gru_whh_t"], params["gru_bhh"],
      params["proj_w"], params["proj_b"],
      params["enh_w"], params["enh_b"],
      params["attn_w"], params["attn_b"], params["attn_v"],
      params["fc2_w"], params["fc2_b"])


# ============================ forward pass ===================================
def improved_phi_fc_forward(audio, params):
    B, S = audio.shape

    # --- MelSpectrogram (XLA glue: reflect pad + hann frames + rFFT) ---------
    # TODO(synk): FFT has no Pallas TPU primitive; framing/FFT kept in XLA.
    pad = N_FFT // 2
    padded = jnp.pad(audio, ((0, 0), (pad, pad)), mode="reflect")
    n_frames = S // HOP + 1
    idx = (jnp.arange(n_frames) * HOP)[:, None] + jnp.arange(N_FFT)[None, :]
    frames = padded[:, idx]                                   # (B, T, n_fft)
    win = 0.5 * (1.0 - jnp.cos(2.0 * jnp.pi * jnp.arange(N_FFT) / N_FFT))
    spec = jnp.fft.rfft(frames * win, axis=-1)                # (B, T, n_fft//2+1)
    power = spec.real ** 2 + spec.imag ** 2                   # no abs->sqrt->square
    mel = jnp.dot(power, params["mel_fb"])                    # (B, T, n_mels) channels-last

    # --- everything else: ONE fused Pallas kernel ----------------------------
    return fused_post_fft(mel, params)                        # (B, num_classes)


# ============================ parameters =====================================
def init_params(key):
    ks = jax.random.split(key, 16)

    def rnd(k, shape, scale=0.1):
        return scale * jax.random.normal(k, shape, dtype=jnp.float32)

    H, F, M, C = HIDDEN, BASE_FILTERS, N_MELS, NUM_CLASSES
    return {
        "mel_fb": make_mel_fb(N_FFT // 2 + 1, M, SAMPLE_RATE),
        # phi stand-in (W1|W2 concatenated along output dim)
        "phi_w": rnd(ks[0], (M, 2 * F)), "phi_b": rnd(ks[1], (1, 2 * F)),
        # GRU input-to-hidden, packed [r; z; n], pre-transposed for x @ W
        "gru_wih_t": rnd(ks[2], (F, 3 * H)), "gru_bih": rnd(ks[3], (1, 3 * H)),
        # GRU hidden-to-hidden, packed [r; z; n], pre-transposed for h @ W
        "gru_whh_t": rnd(ks[4], (H, 3 * H)), "gru_bhh": rnd(ks[5], (1, 3 * H)),
        # head
        "proj_w": rnd(ks[6], (H, H)), "proj_b": jnp.zeros((1, H), jnp.float32),
        "enh_w": rnd(ks[7], (H, H)), "enh_b": jnp.zeros((1, H), jnp.float32),
        "attn_w": rnd(ks[8], (H, H)), "attn_b": jnp.zeros((1, H), jnp.float32),
        "attn_v": rnd(ks[9], (1, H)),        # stored as a row: VPU dot in-kernel
        "fc2_w": rnd(ks[10], (H, C)), "fc2_b": jnp.zeros((1, C), jnp.float32),
    }


# ============================ main ===========================================
if __name__ == "__main__":
    key = jax.random.PRNGKey(0)
    k_audio, k_params = jax.random.split(key)
    audio = jax.random.normal(k_audio, (BATCH, N_SAMPLES), dtype=jnp.float32)
    params = init_params(k_params)

    fwd = jax.jit(improved_phi_fc_forward)
    logits = fwd(audio, params)
    logits = jax.block_until_ready(logits)
    assert logits.shape == (BATCH, NUM_CLASSES), logits.shape
    assert bool(jnp.all(jnp.isfinite(logits)))
    print("KERNEL_OK")
</pallas_src>

<mosaic_0001>
module attributes {stable_mosaic.version = 11 : i64} {
  func.func @fused_kernel(%arg0: i32, %arg1: memref<2x11x64xf32, #tpu.memory_space<vmem>>, %arg2: memref<64x64xf32, #tpu.memory_space<vmem>>, %arg3: memref<1x64xf32, #tpu.memory_space<vmem>>, %arg4: memref<32x96xf32, #tpu.memory_space<vmem>>, %arg5: memref<1x96xf32, #tpu.memory_space<vmem>>, %arg6: memref<32x96xf32, #tpu.memory_space<vmem>>, %arg7: memref<1x96xf32, #tpu.memory_space<vmem>>, %arg8: memref<32x32xf32, #tpu.memory_space<vmem>>, %arg9: memref<1x32xf32, #tpu.memory_space<vmem>>, %arg10: memref<32x32xf32, #tpu.memory_space<vmem>>, %arg11: memref<1x32xf32, #tpu.memory_space<vmem>>, %arg12: memref<32x32xf32, #tpu.memory_space<vmem>>, %arg13: memref<1x32xf32, #tpu.memory_space<vmem>>, %arg14: memref<1x32xf32, #tpu.memory_space<vmem>>, %arg15: memref<32x10xf32, #tpu.memory_space<vmem>>, %arg16: memref<1x10xf32, #tpu.memory_space<vmem>>, %arg17: memref<2x10xf32, #tpu.memory_space<vmem>>) attributes {dimension_semantics = [#tpu.dimension_semantics<arbitrary>], iteration_bounds = array<i64: 1>, scalar_prefetch = 0 : i64, scratch_operands = 0 : i64, tpu.core_type = #tpu.core_type<tc>, window_params = [{pipeline_mode = #tpu.pipeline_mode<synchronous>, transform_indices = @transform_0, window_bounds = array<i64: 2, 11, 64>}, {pipeline_mode = #tpu.pipeline_mode<synchronous>, transform_indices = @transform_1, window_bounds = array<i64: 64, 64>}, {pipeline_mode = #tpu.pipeline_mode<synchronous>, transform_indices = @transform_2, window_bounds = array<i64: 1, 64>}, {pipeline_mode = #tpu.pipeline_mode<synchronous>, transform_indices = @transform_3, window_bounds = array<i64: 32, 96>}, {pipeline_mode = #tpu.pipeline_mode<synchronous>, transform_indices = @transform_4, window_bounds = array<i64: 1, 96>}, {pipeline_mode = #tpu.pipeline_mode<synchronous>, transform_indices = @transform_5, window_bounds = array<i64: 32, 96>}, {pipeline_mode = #tpu.pipeline_mode<synchronous>, transform_indices = @transform_6, window_bounds = array<i64: 1, 96>}, {pipeline_mode = #tpu.pipeline_mode<synchronous>, transform_indices = @transform_7, window_bounds = array<i64: 32, 32>}, {pipeline_mode = #tpu.pipeline_mode<synchronous>, transform_indices = @transform_8, window_bounds = array<i64: 1, 32>}, {pipeline_mode = #tpu.pipeline_mode<synchronous>, transform_indices = @transform_9, window_bounds = array<i64: 32, 32>}, {pipeline_mode = #tpu.pipeline_mode<synchronous>, transform_indices = @transform_10, window_bounds = array<i64: 1, 32>}, {pipeline_mode = #tpu.pipeline_mode<synchronous>, transform_indices = @transform_11, window_bounds = array<i64: 32, 32>}, {pipeline_mode = #tpu.pipeline_mode<synchronous>, transform_indices = @transform_12, window_bounds = array<i64: 1, 32>}, {pipeline_mode = #tpu.pipeline_mode<synchronous>, transform_indices = @transform_13, window_bounds = array<i64: 1, 32>}, {pipeline_mode = #tpu.pipeline_mode<synchronous>, transform_indices = @transform_14, window_bounds = array<i64: 32, 10>}, {pipeline_mode = #tpu.pipeline_mode<synchronous>, transform_indices = @transform_15, window_bounds = array<i64: 1, 10>}, {pipeline_mode = #tpu.pipeline_mode<synchronous>, transform_indices = @transform_16, window_bounds = array<i64: 2, 10>}]} {
    %c0 = arith.constant 0 : index
    %c0_0 = arith.constant 0 : index
    %c0_1 = arith.constant 0 : index
    %0 = vector.load %arg1[%c0, %c0_0, %c0_1] : memref<2x11x64xf32, #tpu.memory_space<vmem>>, vector<1x11x64xf32>
    %1 = vector.shape_cast %0 : vector<1x11x64xf32> to vector<11x64xf32>
    %cst = arith.constant 1.000000e-10 : f32
    %2 = vector.broadcast %cst : f32 to vector<11x64xf32>
    %3 = arith.maximumf %1, %2 : vector<11x64xf32>
    %4 = math.log %3 : vector<11x64xf32>
    %cst_2 = arith.constant 0.434294492 : f32
    %5 = vector.broadcast %cst_2 : f32 to vector<11x64xf32>
    %6 = arith.mulf %4, %5 : vector<11x64xf32>
    %cst_3 = arith.constant 1.000000e+01 : f32
    %7 = vector.broadcast %cst_3 : f32 to vector<11x64xf32>
    %8 = arith.mulf %7, %6 : vector<11x64xf32>
    %9 = vector.shape_cast %8 : vector<11x64xf32> to vector<1x11x64xf32>
    %cst_4 = arith.constant dense<0.000000e+00> : vector<1xf32>
    %10 = vector.multi_reduction <add>, %9, %cst_4 [1, 2] : vector<1x11x64xf32> to vector<1xf32>
    %11 = vector.shape_cast %10 : vector<1xf32> to vector<1x1x1xf32>
    %12 = vector.extract %11[0, 0, 0] : f32 from vector<1x1x1xf32>
    %13 = vector.broadcast %12 : f32 to vector<1x1xf32>
    %14 = arith.mulf %8, %8 : vector<11x64xf32>
    %15 = vector.shape_cast %14 : vector<11x64xf32> to vector<1x11x64xf32>
    %cst_5 = arith.constant dense<0.000000e+00> : vector<1xf32>
    %16 = vector.multi_reduction <add>, %15, %cst_5 [1, 2] : vector<1x11x64xf32> to vector<1xf32>
    %17 = vector.shape_cast %16 : vector<1xf32> to vector<1x1x1xf32>
    %18 = vector.extract %17[0, 0, 0] : f32 from vector<1x1x1xf32>
    %19 = vector.broadcast %18 : f32 to vector<1x1xf32>
    %cst_6 = arith.constant 0.00142045459 : f32
    %20 = vector.broadcast %cst_6 : f32 to vector<1x1xf32>
    %21 = arith.mulf %13, %20 : vector<1x1xf32>
    %cst_7 = arith.constant 0.00142045459 : f32
    %22 = vector.broadcast %cst_7 : f32 to vector<1x1xf32>
    %23 = arith.mulf %19, %22 : vector<1x1xf32>
    %24 = arith.mulf %21, %21 : vector<1x1xf32>
    %25 = arith.subf %23, %24 : vector<1x1xf32>
    %cst_8 = arith.constant 1.00142252 : f32
    %26 = vector.broadcast %cst_8 : f32 to vector<1x1xf32>
    %27 = arith.mulf %25, %26 : vector<1x1xf32>
    %cst_9 = arith.constant 0.000000e+00 : f32
    %28 = vector.broadcast %cst_9 : f32 to vector<1x1xf32>
    %29 = arith.maximumf %27, %28 : vector<1x1xf32>
    %30 = math.sqrt %29 : vector<1x1xf32>
    %cst_10 = arith.constant 9.99999974E-6 : f32
    %31 = vector.broadcast %cst_10 : f32 to vector<1x1xf32>
    %32 = arith.addf %30, %31 : vector<1x1xf32>
    %33 = vector.broadcast %21 : vector<1x1xf32> to vector<11x64xf32>
    %34 = arith.subf %8, %33 : vector<11x64xf32>
    %35 = vector.broadcast %32 : vector<1x1xf32> to vector<11x64xf32>
    %36 = arith.divf %34, %35 : vector<11x64xf32>
    %c1 = arith.constant 1 : index
    %c0_11 = arith.constant 0 : index
    %c0_12 = arith.constant 0 : index
    %37 = vector.load %arg1[%c1, %c0_11, %c0_12] : memref<2x11x64xf32, #tpu.memory_space<vmem>>, vector<1x11x64xf32>
    %38 = vector.shape_cast %37 : vector<1x11x64xf32> to vector<11x64xf32>
    %cst_13 = arith.constant 1.000000e-10 : f32
    %39 = vector.broadcast %cst_13 : f32 to vector<11x64xf32>
    %40 = arith.maximumf %38, %39 : vector<11x64xf32>
    %41 = math.log %40 : vector<11x64xf32>
    %cst_14 = arith.constant 0.434294492 : f32
    %42 = vector.broadcast %cst_14 : f32 to vector<11x64xf32>
    %43 = arith.mulf %41, %42 : vector<11x64xf32>
    %cst_15 = arith.constant 1.000000e+01 : f32
    %44 = vector.broadcast %cst_15 : f32 to vector<11x64xf32>
    %45 = arith.mulf %44, %43 : vector<11x64xf32>
    %46 = vector.shape_cast %45 : vector<11x64xf32> to vector<1x11x64xf32>
    %cst_16 = arith.constant dense<0.000000e+00> : vector<1xf32>
    %47 = vector.multi_reduction <add>, %46, %cst_16 [1, 2] : vector<1x11x64xf32> to vector<1xf32>
    %48 = vector.shape_cast %47 : vector<1xf32> to vector<1x1x1xf32>
    %49 = vector.extract %48[0, 0, 0] : f32 from vector<1x1x1xf32>
    %50 = vector.broadcast %49 : f32 to vector<1x1xf32>
    %51 = arith.mulf %45, %45 : vector<11x64xf32>
    %52 = vector.shape_cast %51 : vector<11x64xf32> to vector<1x11x64xf32>
    %cst_17 = arith.constant dense<0.000000e+00> : vector<1xf32>
    %53 = vector.multi_reduction <add>, %52, %cst_17 [1, 2] : vector<1x11x64xf32> to vector<1xf32>
    %54 = vector.shape_cast %53 : vector<1xf32> to vector<1x1x1xf32>
    %55 = vector.extract %54[0, 0, 0] : f32 from vector<1x1x1xf32>
    %56 = vector.broadcast %55 : f32 to vector<1x1xf32>
    %cst_18 = arith.constant 0.00142045459 : f32
    %57 = vector.broadcast %cst_18 : f32 to vector<1x1xf32>
    %58 = arith.mulf %50, %57 : vector<1x1xf32>
    %cst_19 = arith.constant 0.00142045459 : f32
    %59 = vector.broadcast %cst_19 : f32 to vector<1x1xf32>
    %60 = arith.mulf %56, %59 : vector<1x1xf32>
    %61 = arith.mulf %58, %58 : vector<1x1xf32>
    %62 = arith.subf %60, %61 : vector<1x1xf32>
    %cst_20 = arith.constant 1.00142252 : f32
    %63 = vector.broadcast %cst_20 : f32 to vector<1x1xf32>
    %64 = arith.mulf %62, %63 : vector<1x1xf32>
    %cst_21 = arith.constant 0.000000e+00 : f32
    %65 = vector.broadcast %cst_21 : f32 to vector<1x1xf32>
    %66 = arith.maximumf %64, %65 : vector<1x1xf32>
    %67 = math.sqrt %66 : vector<1x1xf32>
    %cst_22 = arith.constant 9.99999974E-6 : f32
    %68 = vector.broadcast %cst_22 : f32 to vector<1x1xf32>
    %69 = arith.addf %67, %68 : vector<1x1xf32>
    %70 = vector.broadcast %58 : vector<1x1xf32> to vector<11x64xf32>
    %71 = arith.subf %45, %70 : vector<11x64xf32>
    %72 = vector.broadcast %69 : vector<1x1xf32> to vector<11x64xf32>
    %73 = arith.divf %71, %72 : vector<11x64xf32>
    %74 = tpu.concatenate %36, %73 in 0 : vector<11x64xf32>, vector<11x64xf32> -> vector<22x64xf32>
    %c0_23 = arith.constant 0 : index
    %c0_24 = arith.constant 0 : index
    %75 = vector.load %arg2[%c0_23, %c0_24] : memref<64x64xf32, #tpu.memory_space<vmem>>, vector<64x64xf32>
    %cst_25 = arith.constant dense<0.000000e+00> : vector<22x64xf32>
    %76 = tpu.matmul %74, %75, %cst_25 {dimension_numbers = #tpu.dot_dimension_numbers<[1], [0], [0], [1], [0, 0, 1, 1], [], []>} : vector<22x64xf32>, vector<64x64xf32>, vector<22x64xf32> -> vector<22x64xf32>
    %c0_26 = arith.constant 0 : index
    %c0_27 = arith.constant 0 : index
    %77 = vector.load %arg3[%c0_26, %c0_27] : memref<1x64xf32, #tpu.memory_space<vmem>>, vector<1x64xf32>
    %78 = vector.broadcast %77 : vector<1x64xf32> to vector<22x64xf32>
    %79 = arith.addf %76, %78 : vector<22x64xf32>
    %80 = vector.extract_strided_slice %79 {offsets = [0, 0], sizes = [22, 32], strides = [1, 1]} : vector<22x64xf32> to vector<22x32xf32>
    %cst_28 = arith.constant 0.000000e+00 : f32
    %81 = vector.broadcast %cst_28 : f32 to vector<22x32xf32>
    %82 = arith.maximumf %80, %81 : vector<22x32xf32>
    %83 = vector.extract_strided_slice %79 {offsets = [0, 32], sizes = [22, 32], strides = [1, 1]} : vector<22x64xf32> to vector<22x32xf32>
    %84 = arith.addf %82, %83 : vector<22x32xf32>
    %c0_29 = arith.constant 0 : index
    %c0_30 = arith.constant 0 : index
    %85 = vector.load %arg4[%c0_29, %c0_30] : memref<32x96xf32, #tpu.memory_space<vmem>>, vector<32x96xf32>
    %cst_31 = arith.constant dense<0.000000e+00> : vector<22x96xf32>
    %86 = tpu.matmul %84, %85, %cst_31 {dimension_numbers = #tpu.dot_dimension_numbers<[1], [0], [0], [1], [0, 0, 1, 1], [], []>} : vector<22x32xf32>, vector<32x96xf32>, vector<22x96xf32> -> vector<22x96xf32>
    %c0_32 = arith.constant 0 : index
    %c0_33 = arith.constant 0 : index
    %87 = vector.load %arg5[%c0_32, %c0_33] : memref<1x96xf32, #tpu.memory_space<vmem>>, vector<1x96xf32>
    %88 = vector.broadcast %87 : vector<1x96xf32> to vector<22x96xf32>
    %89 = arith.addf %86, %88 : vector<22x96xf32>
    %90 = vector.extract_strided_slice %89 {offsets = [0, 0], sizes = [22, 32], strides = [1, 1]} : vector<22x96xf32> to vector<22x32xf32>
    %91 = vector.extract_strided_slice %89 {offsets = [0, 32], sizes = [22, 32], strides = [1, 1]} : vector<22x96xf32> to vector<22x32xf32>
    %92 = vector.extract_strided_slice %89 {offsets = [0, 64], sizes = [22, 32], strides = [1, 1]} : vector<22x96xf32> to vector<22x32xf32>
    %c0_34 = arith.constant 0 : index
    %c0_35 = arith.constant 0 : index
    %93 = vector.load %arg6[%c0_34, %c0_35] : memref<32x96xf32, #tpu.memory_space<vmem>>, vector<32x96xf32>
    %c0_36 = arith.constant 0 : index
    %c0_37 = arith.constant 0 : index
    %94 = vector.load %arg7[%c0_36, %c0_37] : memref<1x96xf32, #tpu.memory_space<vmem>>, vector<1x96xf32>
    %cst_38 = arith.constant 0.000000e+00 : f32
    %95 = vector.broadcast %cst_38 : f32 to vector<2x32xf32>
    %96 = vector.extract_strided_slice %90 {offsets = [0, 0], sizes = [1, 32], strides = [1, 1]} : vector<22x32xf32> to vector<1x32xf32>
    %97 = vector.extract_strided_slice %90 {offsets = [11, 0], sizes = [1, 32], strides = [1, 1]} : vector<22x32xf32> to vector<1x32xf32>
    %98 = tpu.concatenate %96, %97 in 0 : vector<1x32xf32>, vector<1x32xf32> -> vector<2x32xf32>
    %99 = vector.extract_strided_slice %91 {offsets = [0, 0], sizes = [1, 32], strides = [1, 1]} : vector<22x32xf32> to vector<1x32xf32>
    %100 = vector.extract_strided_slice %91 {offsets = [11, 0], sizes = [1, 32], strides = [1, 1]} : vector<22x32xf32> to vector<1x32xf32>
    %101 = tpu.concatenate %99, %100 in 0 : vector<1x32xf32>, vector<1x32xf32> -> vector<2x32xf32>
    %102 = vector.extract_strided_slice %92 {offsets = [0, 0], sizes = [1, 32], strides = [1, 1]} : vector<22x32xf32> to vector<1x32xf32>
    %103 = vector.extract_strided_slice %92 {offsets = [11, 0], sizes = [1, 32], strides = [1, 1]} : vector<22x32xf32> to vector<1x32xf32>
    %104 = tpu.concatenate %102, %103 in 0 : vector<1x32xf32>, vector<1x32xf32> -> vector<2x32xf32>
    %cst_39 = arith.constant dense<0.000000e+00> : vector<2x96xf32>
    %105 = tpu.matmul %95, %93, %cst_39 {dimension_numbers = #tpu.dot_dimension_numbers<[1], [0], [0], [1], [0, 0, 1, 1], [], []>} : vector<2x32xf32>, vector<32x96xf32>, vector<2x96xf32> -> vector<2x96xf32>
    %106 = vector.broadcast %94 : vector<1x96xf32> to vector<2x96xf32>
    %107 = arith.addf %105, %106 : vector<2x96xf32>
    %108 = vector.extract_strided_slice %107 {offsets = [0, 0], sizes = [2, 32], strides = [1, 1]} : vector<2x96xf32> to vector<2x32xf32>
    %109 = arith.addf %98, %108 : vector<2x32xf32>
    %110 = arith.negf %109 : vector<2x32xf32>
    %111 = math.exp %110 : vector<2x32xf32>
    %cst_40 = arith.constant 1.000000e+00 : f32
    %112 = vector.broadcast %cst_40 : f32 to vector<2x32xf32>
    %113 = arith.addf %112, %111 : vector<2x32xf32>
    %114 = arith.divf %112, %113 : vector<2x32xf32>
    %115 = vector.extract_strided_slice %107 {offsets = [0, 32], sizes = [2, 32], strides = [1, 1]} : vector<2x96xf32> to vector<2x32xf32>
    %116 = arith.addf %101, %115 : vector<2x32xf32>
    %117 = arith.negf %116 : vector<2x32xf32>
    %118 = math.exp %117 : vector<2x32xf32>
    %cst_41 = arith.constant 1.000000e+00 : f32
    %119 = vector.broadcast %cst_41 : f32 to vector<2x32xf32>
    %120 = arith.addf %119, %118 : vector<2x32xf32>
    %121 = arith.divf %119, %120 : vector<2x32xf32>
    %122 = vector.extract_strided_slice %107 {offsets = [0, 64], sizes = [2, 32], strides = [1, 1]} : vector<2x96xf32> to vector<2x32xf32>
    %123 = arith.mulf %114, %122 : vector<2x32xf32>
    %124 = arith.addf %104, %123 : vector<2x32xf32>
    %125 = math.tanh %124 : vector<2x32xf32>
    %cst_42 = arith.constant 1.000000e+00 : f32
    %126 = vector.broadcast %cst_42 : f32 to vector<2x32xf32>
    %127 = arith.subf %126, %121 : vector<2x32xf32>
    %128 = arith.mulf %127, %125 : vector<2x32xf32>
    %129 = arith.mulf %121, %95 : vector<2x32xf32>
    %130 = arith.addf %128, %129 : vector<2x32xf32>
    %131 = vector.extract_strided_slice %90 {offsets = [1, 0], sizes = [1, 32], strides = [1, 1]} : vector<22x32xf32> to vector<1x32xf32>
    %132 = vector.extract_strided_slice %90 {offsets = [12, 0], sizes = [1, 32], strides = [1, 1]} : vector<22x32xf32> to vector<1x32xf32>
    %133 = tpu.concatenate %131, %132 in 0 : vector<1x32xf32>, vector<1x32xf32> -> vector<2x32xf32>
    %134 = vector.extract_strided_slice %91 {offsets = [1, 0], sizes = [1, 32], strides = [1, 1]} : vector<22x32xf32> to vector<1x32xf32>
    %135 = vector.extract_strided_slice %91 {offsets = [12, 0], sizes = [1, 32], strides = [1, 1]} : vector<22x32xf32> to vector<1x32xf32>
    %136 = tpu.concatenate %134, %135 in 0 : vector<1x32xf32>, vector<1x32xf32> -> vector<2x32xf32>
    %137 = vector.extract_strided_slice %92 {offsets = [1, 0], sizes = [1, 32], strides = [1, 1]} : vector<22x32xf32> to vector<1x32xf32>
    %138 = vector.extract_strided_slice %92 {offsets = [12, 0], sizes = [1, 32], strides = [1, 1]} : vector<22x32xf32> to vector<1x32xf32>
    %139 = tpu.concatenate %137, %138 in 0 : vector<1x32xf32>, vector<1x32xf32> -> vector<2x32xf32>
    %cst_43 = arith.constant dense<0.000000e+00> : vector<2x96xf32>
    %140 = tpu.matmul %130, %93, %cst_43 {dimension_numbers = #tpu.dot_dimension_numbers<[1], [0], [0], [1], [0, 0, 1, 1], [], []>} : vector<2x32xf32>, vector<32x96xf32>, vector<2x96xf32> -> vector<2x96xf32>
    %141 = vector.broadcast %94 : vector<1x96xf32> to vector<2x96xf32>
    %142 = arith.addf %140, %141 : vector<2x96xf32>
    %143 = vector.extract_strided_slice %142 {offsets = [0, 0], sizes = [2, 32], strides = [1, 1]} : vector<2x96xf32> to vector<2x32xf32>
    %144 = arith.addf %133, %143 : vector<2x32xf32>
    %145 = arith.negf %144 : vector<2x32xf32>
    %146 = math.exp %145 : vector<2x32xf32>
    %cst_44 = arith.constant 1.000000e+00 : f32
    %147 = vector.broadcast %cst_44 : f32 to vector<2x32xf32>
    %148 = arith.addf %147, %146 : vector<2x32xf32>
    %149 = arith.divf %147, %148 : vector<2x32xf32>
    %150 = vector.extract_strided_slice %142 {offsets = [0, 32], sizes = [2, 32], strides = [1, 1]} : vector<2x96xf32> to vector<2x32xf32>
    %151 = arith.addf %136, %150 : vector<2x32xf32>
    %152 = arith.negf %151 : vector<2x32xf32>
    %153 = math.exp %152 : vector<2x32xf32>
    %cst_45 = arith.constant 1.000000e+00 : f32
    %154 = vector.broadcast %cst_45 : f32 to vector<2x32xf32>
    %155 = arith.addf %154, %153 : vector<2x32xf32>
    %156 = arith.divf %154, %155 : vector<2x32xf32>
    %157 = vector.extract_strided_slice %142 {offsets = [0, 64], sizes = [2, 32], strides = [1, 1]} : vector<2x96xf32> to vector<2x32xf32>
    %158 = arith.mulf %149, %157 : vector<2x32xf32>
    %159 = arith.addf %139, %158 : vector<2x32xf32>
    %160 = math.tanh %159 : vector<2x32xf32>
    %cst_46 = arith.constant 1.000000e+00 : f32
    %161 = vector.broadcast %cst_46 : f32 to vector<2x32xf32>
    %162 = arith.subf %161, %156 : vector<2x32xf32>
    %163 = arith.mulf %162, %160 : vector<2x32xf32>
    %164 = arith.mulf %156, %130 : vector<2x32xf32>
    %165 = arith.addf %163, %164 : vector<2x32xf32>
    %166 = vector.extract_strided_slice %90 {offsets = [2, 0], sizes = [1, 32], strides = [1, 1]} : vector<22x32xf32> to vector<1x32xf32>
    %167 = vector.extract_strided_slice %90 {offsets = [13, 0], sizes = [1, 32], strides = [1, 1]} : vector<22x32xf32> to vector<1x32xf32>
    %168 = tpu.concatenate %166, %167 in 0 : vector<1x32xf32>, vector<1x32xf32> -> vector<2x32xf32>
    %169 = vector.extract_strided_slice %91 {offsets = [2, 0], sizes = [1, 32], strides = [1, 1]} : vector<22x32xf32> to vector<1x32xf32>
    %170 = vector.extract_strided_slice %91 {offsets = [13, 0], sizes = [1, 32], strides = [1, 1]} : vector<22x32xf32> to vector<1x32xf32>
    %171 = tpu.concatenate %169, %170 in 0 : vector<1x32xf32>, vector<1x32xf32> -> vector<2x32xf32>
    %172 = vector.extract_strided_slice %92 {offsets = [2, 0], sizes = [1, 32], strides = [1, 1]} : vector<22x32xf32> to vector<1x32xf32>
    %173 = vector.extract_strided_slice %92 {offsets = [13, 0], sizes = [1, 32], strides = [1, 1]} : vector<22x32xf32> to vector<1x32xf32>
    %174 = tpu.concatenate %172, %173 in 0 : vector<1x32xf32>, vector<1x32xf32> -> vector<2x32xf32>
    %cst_47 = arith.constant dense<0.000000e+00> : vector<2x96xf32>
    %175 = tpu.matmul %165, %93, %cst_47 {dimension_numbers = #tpu.dot_dimension_numbers<[1], [0], [0], [1], [0, 0, 1, 1], [], []>} : vector<2x32xf32>, vector<32x96xf32>, vector<2x96xf32> -> vector<2x96xf32>
    %176 = vector.broadcast %94 : vector<1x96xf32> to vector<2x96xf32>
    %177 = arith.addf %175, %176 : vector<2x96xf32>
    %178 = vector.extract_strided_slice %177 {offsets = [0, 0], sizes = [2, 32], strides = [1, 1]} : vector<2x96xf32> to vector<2x32xf32>
    %179 = arith.addf %168, %178 : vector<2x32xf32>
    %180 = arith.negf %179 : vector<2x32xf32>
    %181 = math.exp %180 : vector<2x32xf32>
    %cst_48 = arith.constant 1.000000e+00 : f32
    %182 = vector.broadcast %cst_48 : f32 to vector<2x32xf32>
    %183 = arith.addf %182, %181 : vector<2x32xf32>
    %184 = arith.divf %182, %183 : vector<2x32xf32>
    %185 = vector.extract_strided_slice %177 {offsets = [0, 32], sizes = [2, 32], strides = [1, 1]} : vector<2x96xf32> to vector<2x32xf32>
    %186 = arith.addf %171, %185 : vector<2x32xf32>
    %187 = arith.negf %186 : vector<2x32xf32>
    %188 = math.exp %187 : vector<2x32xf32>
    %cst_49 = arith.constant 1.000000e+00 : f32
    %189 = vector.broadcast %cst_49 : f32 to vector<2x32xf32>
    %190 = arith.addf %189, %188 : vector<2x32xf32>
    %191 = arith.divf %189, %190 : vector<2x32xf32>
    %192 = vector.extract_strided_slice %177 {offsets = [0, 64], sizes = [2, 32], strides = [1, 1]} : vector<2x96xf32> to vector<2x32xf32>
    %193 = arith.mulf %184, %192 : vector<2x32xf32>
    %194 = arith.addf %174, %193 : vector<2x32xf32>
    %195 = math.tanh %194 : vector<2x32xf32>
    %cst_50 = arith.constant 1.000000e+00 : f32
    %196 = vector.broadcast %cst_50 : f32 to vector<2x32xf32>
    %197 = arith.subf %196, %191 : vector<2x32xf32>
    %198 = arith.mulf %197, %195 : vector<2x32xf32>
    %199 = arith.mulf %191, %165 : vector<2x32xf32>
    %200 = arith.addf %198, %199 : vector<2x32xf32>
    %201 = vector.extract_strided_slice %90 {offsets = [3, 0], sizes = [1, 32], strides = [1, 1]} : vector<22x32xf32> to vector<1x32xf32>
    %202 = vector.extract_strided_slice %90 {offsets = [14, 0], sizes = [1, 32], strides = [1, 1]} : vector<22x32xf32> to vector<1x32xf32>
    %203 = tpu.concatenate %201, %202 in 0 : vector<1x32xf32>, vector<1x32xf32> -> vector<2x32xf32>
    %204 = vector.extract_strided_slice %91 {offsets = [3, 0], sizes = [1, 32], strides = [1, 1]} : vector<22x32xf32> to vector<1x32xf32>
    %205 = vector.extract_strided_slice %91 {offsets = [14, 0], sizes = [1, 32], strides = [1, 1]} : vector<22x32xf32> to vector<1x32xf32>
    %206 = tpu.concatenate %204, %205 in 0 : vector<1x32xf32>, vector<1x32xf32> -> vector<2x32xf32>
    %207 = vector.extract_strided_slice %92 {offsets = [3, 0], sizes = [1, 32], strides = [1, 1]} : vector<22x32xf32> to vector<1x32xf32>
    %208 = vector.extract_strided_slice %92 {offsets = [14, 0], sizes = [1, 32], strides = [1, 1]} : vector<22x32xf32> to vector<1x32xf32>
    %209 = tpu.concatenate %207, %208 in 0 : vector<1x32xf32>, vector<1x32xf32> -> vector<2x32xf32>
    %cst_51 = arith.constant dense<0.000000e+00> : vector<2x96xf32>
    %210 = tpu.matmul %200, %93, %cst_51 {dimension_numbers = #tpu.dot_dimension_numbers<[1], [0], [0], [1], [0, 0, 1, 1], [], []>} : vector<2x32xf32>, vector<32x96xf32>, vector<2x96xf32> -> vector<2x96xf32>
    %211 = vector.broadcast %94 : vector<1x96xf32> to vector<2x96xf32>
    %212 = arith.addf %210, %211 : vector<2x96xf32>
    %213 = vector.extract_strided_slice %212 {offsets = [0, 0], sizes = [2, 32], strides = [1, 1]} : vector<2x96xf32> to vector<2x32xf32>
    %214 = arith.addf %203, %213 : vector<2x32xf32>
    %215 = arith.negf %214 : vector<2x32xf32>
    %216 = math.exp %215 : vector<2x32xf32>
    %cst_52 = arith.constant 1.000000e+00 : f32
    %217 = vector.broadcast %cst_52 : f32 to vector<2x32xf32>
    %218 = arith.addf %217, %216 : vector<2x32xf32>
    %219 = arith.divf %217, %218 : vector<2x32xf32>
    %220 = vector.extract_strided_slice %212 {offsets = [0, 32], sizes = [2, 32], strides = [1, 1]} : vector<2x96xf32> to vector<2x32xf32>
    %221 = arith.addf %206, %220 : vector<2x32xf32>
    %222 = arith.negf %221 : vector<2x32xf32>
    %223 = math.exp %222 : vector<2x32xf32>
    %cst_53 = arith.constant 1.000000e+00 : f32
    %224 = vector.broadcast %cst_53 : f32 to vector<2x32xf32>
    %225 = arith.addf %224, %223 : vector<2x32xf32>
    %226 = arith.divf %224, %225 : vector<2x32xf32>
    %227 = vector.extract_strided_slice %212 {offsets = [0, 64], sizes = [2, 32], strides = [1, 1]} : vector<2x96xf32> to vector<2x32xf32>
    %228 = arith.mulf %219, %227 : vector<2x32xf32>
    %229 = arith.addf %209, %228 : vector<2x32xf32>
    %230 = math.tanh %229 : vector<2x32xf32>
    %cst_54 = arith.constant 1.000000e+00 : f32
    %231 = vector.broadcast %cst_54 : f32 to vector<2x32xf32>
    %232 = arith.subf %231, %226 : vector<2x32xf32>
    %233 = arith.mulf %232, %230 : vector<2x32xf32>
    %234 = arith.mulf %226, %200 : vector<2x32xf32>
    %235 = arith.addf %233, %234 : vector<2x32xf32>
    %236 = vector.extract_strided_slice %90 {offsets = [4, 0], sizes = [1, 32], strides = [1, 1]} : vector<22x32xf32> to vector<1x32xf32>
    %237 = vector.extract_strided_slice %90 {offsets = [15, 0], sizes = [1, 32], strides = [1, 1]} : vector<22x32xf32> to vector<1x32xf32>
    %238 = tpu.concatenate %236, %237 in 0 : vector<1x32xf32>, vector<1x32xf32> -> vector<2x32xf32>
    %239 = vector.extract_strided_slice %91 {offsets = [4, 0], sizes = [1, 32], strides = [1, 1]} : vector<22x32xf32> to vector<1x32xf32>
    %240 = vector.extract_strided_slice %91 {offsets = [15, 0], sizes = [1, 32], strides = [1, 1]} : vector<22x32xf32> to vector<1x32xf32>
    %241 = tpu.concatenate %239, %240 in 0 : vector<1x32xf32>, vector<1x32xf32> -> vector<2x32xf32>
    %242 = vector.extract_strided_slice %92 {offsets = [4, 0], sizes = [1, 32], strides = [1, 1]} : vector<22x32xf32> to vector<1x32xf32>
    %243 = vector.extract_strided_slice %92 {offsets = [15, 0], sizes = [1, 32], strides = [1, 1]} : vector<22x32xf32> to vector<1x32xf32>
    %244 = tpu.concatenate %242, %243 in 0 : vector<1x32xf32>, vector<1x32xf32> -> vector<2x32xf32>
    %cst_55 = arith.constant dense<0.000000e+00> : vector<2x96xf32>
    %245 = tpu.matmul %235, %93, %cst_55 {dimension_numbers = #tpu.dot_dimension_numbers<[1], [0], [0], [1], [0, 0, 1, 1], [], []>} : vector<2x32xf32>, vector<32x96xf32>, vector<2x96xf32> -> vector<2x96xf32>
    %246 = vector.broadcast %94 : vector<1x96xf32> to vector<2x96xf32>
    %247 = arith.addf %245, %246 : vector<2x96xf32>
    %248 = vector.extract_strided_slice %247 {offsets = [0, 0], sizes = [2, 32], strides = [1, 1]} : vector<2x96xf32> to vector<2x32xf32>
    %249 = arith.addf %238, %248 : vector<2x32xf32>
    %250 = arith.negf %249 : vector<2x32xf32>
    %251 = math.exp %250 : vector<2x32xf32>
    %cst_56 = arith.constant 1.000000e+00 : f32
    %252 = vector.broadcast %cst_56 : f32 to vector<2x32xf32>
    %253 = arith.addf %252, %251 : vector<2x32xf32>
    %254 = arith.divf %252, %253 : vector<2x32xf32>
    %255 = vector.extract_strided_slice %247 {offsets = [0, 32], sizes = [2, 32], strides = [1, 1]} : vector<2x96xf32> to vector<2x32xf32>
    %256 = arith.addf %241, %255 : vector<2x32xf32>
    %257 = arith.negf %256 : vector<2x32xf32>
    %258 = math.exp %257 : vector<2x32xf32>
    %cst_57 = arith.constant 1.000000e+00 : f32
    %259 = vector.broadcast %cst_57 : f32 to vector<2x32xf32>
    %260 = arith.addf %259, %258 : vector<2x32xf32>
    %261 = arith.divf %259, %260 : vector<2x32xf32>
    %262 = vector.extract_strided_slice %247 {offsets = [0, 64], sizes = [2, 32], strides = [1, 1]} : vector<2x96xf32> to vector<2x32xf32>
    %263 = arith.mulf %254, %262 : vector<2x32xf32>
    %264 = arith.addf %244, %263 : vector<2x32xf32>
    %265 = math.tanh %264 : vector<2x32xf32>
    %cst_58 = arith.constant 1.000000e+00 : f32
    %266 = vector.broadcast %cst_58 : f32 to vector<2x32xf32>
    %267 = arith.subf %266, %261 : vector<2x32xf32>
    %268 = arith.mulf %267, %265 : vector<2x32xf32>
    %269 = arith.mulf %261, %235 : vector<2x32xf32>
    %270 = arith.addf %268, %269 : vector<2x32xf32>
    %271 = vector.extract_strided_slice %90 {offsets = [5, 0], sizes = [1, 32], strides = [1, 1]} : vector<22x32xf32> to vector<1x32xf32>
    %272 = vector.extract_strided_slice %90 {offsets = [16, 0], sizes = [1, 32], strides = [1, 1]} : vector<22x32xf32> to vector<1x32xf32>
    %273 = tpu.concatenate %271, %272 in 0 : vector<1x32xf32>, vector<1x32xf32> -> vector<2x32xf32>
    %274 = vector.extract_strided_slice %91 {offsets = [5, 0], sizes = [1, 32], strides = [1, 1]} : vector<22x32xf32> to vector<1x32xf32>
    %275 = vector.extract_strided_slice %91 {offsets = [16, 0], sizes = [1, 32], strides = [1, 1]} : vector<22x32xf32> to vector<1x32xf32>
    %276 = tpu.concatenate %274, %275 in 0 : vector<1x32xf32>, vector<1x32xf32> -> vector<2x32xf32>
    %277 = vector.extract_strided_slice %92 {offsets = [5, 0], sizes = [1, 32], strides = [1, 1]} : vector<22x32xf32> to vector<1x32xf32>
    %278 = vector.extract_strided_slice %92 {offsets = [16, 0], sizes = [1, 32], strides = [1, 1]} : vector<22x32xf32> to vector<1x32xf32>
    %279 = tpu.concatenate %277, %278 in 0 : vector<1x32xf32>, vector<1x32xf32> -> vector<2x32xf32>
    %cst_59 = arith.constant dense<0.000000e+00> : vector<2x96xf32>
    %280 = tpu.matmul %270, %93, %cst_59 {dimension_numbers = #tpu.dot_dimension_numbers<[1], [0], [0], [1], [0, 0, 1, 1], [], []>} : vector<2x32xf32>, vector<32x96xf32>, vector<2x96xf32> -> vector<2x96xf32>
    %281 = vector.broadcast %94 : vector<1x96xf32> to vector<2x96xf32>
    %282 = arith.addf %280, %281 : vector<2x96xf32>
    %283 = vector.extract_strided_slice %282 {offsets = [0, 0], sizes = [2, 32], strides = [1, 1]} : vector<2x96xf32> to vector<2x32xf32>
    %284 = arith.addf %273, %283 : vector<2x32xf32>
    %285 = arith.negf %284 : vector<2x32xf32>
    %286 = math.exp %285 : vector<2x32xf32>
    %cst_60 = arith.constant 1.000000e+00 : f32
    %287 = vector.broadcast %cst_60 : f32 to vector<2x32xf32>
    %288 = arith.addf %287, %286 : vector<2x32xf32>
    %289 = arith.divf %287, %288 : vector<2x32xf32>
    %290 = vector.extract_strided_slice %282 {offsets = [0, 32], sizes = [2, 32], strides = [1, 1]} : vector<2x96xf32> to vector<2x32xf32>
    %291 = arith.addf %276, %290 : vector<2x32xf32>
    %292 = arith.negf %291 : vector<2x32xf32>
    %293 = math.exp %292 : vector<2x32xf32>
    %cst_61 = arith.constant 1.000000e+00 : f32
    %294 = vector.broadcast %cst_61 : f32 to vector<2x32xf32>
    %295 = arith.addf %294, %293 : vector<2x32xf32>
    %296 = arith.divf %294, %295 : vector<2x32xf32>
    %297 = vector.extract_strided_slice %282 {offsets = [0, 64], sizes = [2, 32], strides = [1, 1]} : vector<2x96xf32> to vector<2x32xf32>
    %298 = arith.mulf %289, %297 : vector<2x32xf32>
    %299 = arith.addf %279, %298 : vector<2x32xf32>
    %300 = math.tanh %299 : vector<2x32xf32>
    %cst_62 = arith.constant 1.000000e+00 : f32
    %301 = vector.broadcast %cst_62 : f32 to vector<2x32xf32>
    %302 = arith.subf %301, %296 : vector<2x32xf32>
    %303 = arith.mulf %302, %300 : vector<2x32xf32>
    %304 = arith.mulf %296, %270 : vector<2x32xf32>
    %305 = arith.addf %303, %304 : vector<2x32xf32>
    %306 = vector.extract_strided_slice %90 {offsets = [6, 0], sizes = [1, 32], strides = [1, 1]} : vector<22x32xf32> to vector<1x32xf32>
    %307 = vector.extract_strided_slice %90 {offsets = [17, 0], sizes = [1, 32], strides = [1, 1]} : vector<22x32xf32> to vector<1x32xf32>
    %308 = tpu.concatenate %306, %307 in 0 : vector<1x32xf32>, vector<1x32xf32> -> vector<2x32xf32>
    %309 = vector.extract_strided_slice %91 {offsets = [6, 0], sizes = [1, 32], strides = [1, 1]} : vector<22x32xf32> to vector<1x32xf32>
    %310 = vector.extract_strided_slice %91 {offsets = [17, 0], sizes = [1, 32], strides = [1, 1]} : vector<22x32xf32> to vector<1x32xf32>
    %311 = tpu.concatenate %309, %310 in 0 : vector<1x32xf32>, vector<1x32xf32> -> vector<2x32xf32>
    %312 = vector.extract_strided_slice %92 {offsets = [6, 0], sizes = [1, 32], strides = [1, 1]} : vector<22x32xf32> to vector<1x32xf32>
    %313 = vector.extract_strided_slice %92 {offsets = [17, 0], sizes = [1, 32], strides = [1, 1]} : vector<22x32xf32> to vector<1x32xf32>
    %314 = tpu.concatenate %312, %313 in 0 : vector<1x32xf32>, vector<1x32xf32> -> vector<2x32xf32>
    %cst_63 = arith.constant dense<0.000000e+00> : vector<2x96xf32>
    %315 = tpu.matmul %305, %93, %cst_63 {dimension_numbers = #tpu.dot_dimension_numbers<[1], [0], [0], [1], [0, 0, 1, 1], [], []>} : vector<2x32xf32>, vector<32x96xf32>, vector<2x96xf32> -> vector<2x96xf32>
    %316 = vector.broadcast %94 : vector<1x96xf32> to vector<2x96xf32>
    %317 = arith.addf %315, %316 : vector<2x96xf32>
    %318 = vector.extract_strided_slice %317 {offsets = [0, 0], sizes = [2, 32], strides = [1, 1]} : vector<2x96xf32> to vector<2x32xf32>
    %319 = arith.addf %308, %318 : vector<2x32xf32>
    %320 = arith.negf %319 : vector<2x32xf32>
    %321 = math.exp %320 : vector<2x32xf32>
    %cst_64 = arith.constant 1.000000e+00 : f32
    %322 = vector.broadcast %cst_64 : f32 to vector<2x32xf32>
    %323 = arith.addf %322, %321 : vector<2x32xf32>
    %324 = arith.divf %322, %323 : vector<2x32xf32>
    %325 = vector.extract_strided_slice %317 {offsets = [0, 32], sizes = [2, 32], strides = [1, 1]} : vector<2x96xf32> to vector<2x32xf32>
    %326 = arith.addf %311, %325 : vector<2x32xf32>
    %327 = arith.negf %326 : vector<2x32xf32>
    %328 = math.exp %327 : vector<2x32xf32>
    %cst_65 = arith.constant 1.000000e+00 : f32
    %329 = vector.broadcast %cst_65 : f32 to vector<2x32xf32>
    %330 = arith.addf %329, %328 : vector<2x32xf32>
    %331 = arith.divf %329, %330 : vector<2x32xf32>
    %332 = vector.extract_strided_slice %317 {offsets = [0, 64], sizes = [2, 32], strides = [1, 1]} : vector<2x96xf32> to vector<2x32xf32>
    %333 = arith.mulf %324, %332 : vector<2x32xf32>
    %334 = arith.addf %314, %333 : vector<2x32xf32>
    %335 = math.tanh %334 : vector<2x32xf32>
    %cst_66 = arith.constant 1.000000e+00 : f32
    %336 = vector.broadcast %cst_66 : f32 to vector<2x32xf32>
    %337 = arith.subf %336, %331 : vector<2x32xf32>
    %338 = arith.mulf %337, %335 : vector<2x32xf32>
    %339 = arith.mulf %331, %305 : vector<2x32xf32>
    %340 = arith.addf %338, %339 : vector<2x32xf32>
    %341 = vector.extract_strided_slice %90 {offsets = [7, 0], sizes = [1, 32], strides = [1, 1]} : vector<22x32xf32> to vector<1x32xf32>
    %342 = vector.extract_strided_slice %90 {offsets = [18, 0], sizes = [1, 32], strides = [1, 1]} : vector<22x32xf32> to vector<1x32xf32>
    %343 = tpu.concatenate %341, %342 in 0 : vector<1x32xf32>, vector<1x32xf32> -> vector<2x32xf32>
    %344 = vector.extract_strided_slice %91 {offsets = [7, 0], sizes = [1, 32], strides = [1, 1]} : vector<22x32xf32> to vector<1x32xf32>
    %345 = vector.extract_strided_slice %91 {offsets = [18, 0], sizes = [1, 32], strides = [1, 1]} : vector<22x32xf32> to vector<1x32xf32>
    %346 = tpu.concatenate %344, %345 in 0 : vector<1x32xf32>, vector<1x32xf32> -> vector<2x32xf32>
    %347 = vector.extract_strided_slice %92 {offsets = [7, 0], sizes = [1, 32], strides = [1, 1]} : vector<22x32xf32> to vector<1x32xf32>
    %348 = vector.extract_strided_slice %92 {offsets = [18, 0], sizes = [1, 32], strides = [1, 1]} : vector<22x32xf32> to vector<1x32xf32>
    %349 = tpu.concatenate %347, %348 in 0 : vector<1x32xf32>, vector<1x32xf32> -> vector<2x32xf32>
    %cst_67 = arith.constant dense<0.000000e+00> : vector<2x96xf32>
    %350 = tpu.matmul %340, %93, %cst_67 {dimension_numbers = #tpu.dot_dimension_numbers<[1], [0], [0], [1], [0, 0, 1, 1], [], []>} : vector<2x32xf32>, vector<32x96xf32>, vector<2x96xf32> -> vector<2x96xf32>
    %351 = vector.broadcast %94 : vector<1x96xf32> to vector<2x96xf32>
    %352 = arith.addf %350, %351 : vector<2x96xf32>
    %353 = vector.extract_strided_slice %352 {offsets = [0, 0], sizes = [2, 32], strides = [1, 1]} : vector<2x96xf32> to vector<2x32xf32>
    %354 = arith.addf %343, %353 : vector<2x32xf32>
    %355 = arith.negf %354 : vector<2x32xf32>
    %356 = math.exp %355 : vector<2x32xf32>
    %cst_68 = arith.constant 1.000000e+00 : f32
    %357 = vector.broadcast %cst_68 : f32 to vector<2x32xf32>
    %358 = arith.addf %357, %356 : vector<2x32xf32>
    %359 = arith.divf %357, %358 : vector<2x32xf32>
    %360 = vector.extract_strided_slice %352 {offsets = [0, 32], sizes = [2, 32], strides = [1, 1]} : vector<2x96xf32> to vector<2x32xf32>
    %361 = arith.addf %346, %360 : vector<2x32xf32>
    %362 = arith.negf %361 : vector<2x32xf32>
    %363 = math.exp %362 : vector<2x32xf32>
    %cst_69 = arith.constant 1.000000e+00 : f32
    %364 = vector.broadcast %cst_69 : f32 to vector<2x32xf32>
    %365 = arith.addf %364, %363 : vector<2x32xf32>
    %366 = arith.divf %364, %365 : vector<2x32xf32>
    %367 = vector.extract_strided_slice %352 {offsets = [0, 64], sizes = [2, 32], strides = [1, 1]} : vector<2x96xf32> to vector<2x32xf32>
    %368 = arith.mulf %359, %367 : vector<2x32xf32>
    %369 = arith.addf %349, %368 : vector<2x32xf32>
    %370 = math.tanh %369 : vector<2x32xf32>
    %cst_70 = arith.constant 1.000000e+00 : f32
    %371 = vector.broadcast %cst_70 : f32 to vector<2x32xf32>
    %372 = arith.subf %371, %366 : vector<2x32xf32>
    %373 = arith.mulf %372, %370 : vector<2x32xf32>
    %374 = arith.mulf %366, %340 : vector<2x32xf32>
    %375 = arith.addf %373, %374 : vector<2x32xf32>
    %376 = vector.extract_strided_slice %90 {offsets = [8, 0], sizes = [1, 32], strides = [1, 1]} : vector<22x32xf32> to vector<1x32xf32>
    %377 = vector.extract_strided_slice %90 {offsets = [19, 0], sizes = [1, 32], strides = [1, 1]} : vector<22x32xf32> to vector<1x32xf32>
    %378 = tpu.concatenate %376, %377 in 0 : vector<1x32xf32>, vector<1x32xf32> -> vector<2x32xf32>
    %379 = vector.extract_strided_slice %91 {offsets = [8, 0], sizes = [1, 32], strides = [1, 1]} : vector<22x32xf32> to vector<1x32xf32>
    %380 = vector.extract_strided_slice %91 {offsets = [19, 0], sizes = [1, 32], strides = [1, 1]} : vector<22x32xf32> to vector<1x32xf32>
    %381 = tpu.concatenate %379, %380 in 0 : vector<1x32xf32>, vector<1x32xf32> -> vector<2x32xf32>
    %382 = vector.extract_strided_slice %92 {offsets = [8, 0], sizes = [1, 32], strides = [1, 1]} : vector<22x32xf32> to vector<1x32xf32>
    %383 = vector.extract_strided_slice %92 {offsets = [19, 0], sizes = [1, 32], strides = [1, 1]} : vector<22x32xf32> to vector<1x32xf32>
    %384 = tpu.concatenate %382, %383 in 0 : vector<1x32xf32>, vector<1x32xf32> -> vector<2x32xf32>
    %cst_71 = arith.constant dense<0.000000e+00> : vector<2x96xf32>
    %385 = tpu.matmul %375, %93, %cst_71 {dimension_numbers = #tpu.dot_dimension_numbers<[1], [0], [0], [1], [0, 0, 1, 1], [], []>} : vector<2x32xf32>, vector<32x96xf32>, vector<2x96xf32> -> vector<2x96xf32>
    %386 = vector.broadcast %94 : vector<1x96xf32> to vector<2x96xf32>
    %387 = arith.addf %385, %386 : vector<2x96xf32>
    %388 = vector.extract_strided_slice %387 {offsets = [0, 0], sizes = [2, 32], strides = [1, 1]} : vector<2x96xf32> to vector<2x32xf32>
    %389 = arith.addf %378, %388 : vector<2x32xf32>
    %390 = arith.negf %389 : vector<2x32xf32>
    %391 = math.exp %390 : vector<2x32xf32>
    %cst_72 = arith.constant 1.000000e+00 : f32
    %392 = vector.broadcast %cst_72 : f32 to vector<2x32xf32>
    %393 = arith.addf %392, %391 : vector<2x32xf32>
    %394 = arith.divf %392, %393 : vector<2x32xf32>
    %395 = vector.extract_strided_slice %387 {offsets = [0, 32], sizes = [2, 32], strides = [1, 1]} : vector<2x96xf32> to vector<2x32xf32>
    %396 = arith.addf %381, %395 : vector<2x32xf32>
    %397 = arith.negf %396 : vector<2x32xf32>
    %398 = math.exp %397 : vector<2x32xf32>
    %cst_73 = arith.constant 1.000000e+00 : f32
    %399 = vector.broadcast %cst_73 : f32 to vector<2x32xf32>
    %400 = arith.addf %399, %398 : vector<2x32xf32>
    %401 = arith.divf %399, %400 : vector<2x32xf32>
    %402 = vector.extract_strided_slice %387 {offsets = [0, 64], sizes = [2, 32], strides = [1, 1]} : vector<2x96xf32> to vector<2x32xf32>
    %403 = arith.mulf %394, %402 : vector<2x32xf32>
    %404 = arith.addf %384, %403 : vector<2x32xf32>
    %405 = math.tanh %404 : vector<2x32xf32>
    %cst_74 = arith.constant 1.000000e+00 : f32
    %406 = vector.broadcast %cst_74 : f32 to vector<2x32xf32>
    %407 = arith.subf %406, %401 : vector<2x32xf32>
    %408 = arith.mulf %407, %405 : vector<2x32xf32>
    %409 = arith.mulf %401, %375 : vector<2x32xf32>
    %410 = arith.addf %408, %409 : vector<2x32xf32>
    %411 = vector.extract_strided_slice %90 {offsets = [9, 0], sizes = [1, 32], strides = [1, 1]} : vector<22x32xf32> to vector<1x32xf32>
    %412 = vector.extract_strided_slice %90 {offsets = [20, 0], sizes = [1, 32], strides = [1, 1]} : vector<22x32xf32> to vector<1x32xf32>
    %413 = tpu.concatenate %411, %412 in 0 : vector<1x32xf32>, vector<1x32xf32> -> vector<2x32xf32>
    %414 = vector.extract_strided_slice %91 {offsets = [9, 0], sizes = [1, 32], strides = [1, 1]} : vector<22x32xf32> to vector<1x32xf32>
    %415 = vector.extract_strided_slice %91 {offsets = [20, 0], sizes = [1, 32], strides = [1, 1]} : vector<22x32xf32> to vector<1x32xf32>
    %416 = tpu.concatenate %414, %415 in 0 : vector<1x32xf32>, vector<1x32xf32> -> vector<2x32xf32>
    %417 = vector.extract_strided_slice %92 {offsets = [9, 0], sizes = [1, 32], strides = [1, 1]} : vector<22x32xf32> to vector<1x32xf32>
    %418 = vector.extract_strided_slice %92 {offsets = [20, 0], sizes = [1, 32], strides = [1, 1]} : vector<22x32xf32> to vector<1x32xf32>
    %419 = tpu.concatenate %417, %418 in 0 : vector<1x32xf32>, vector<1x32xf32> -> vector<2x32xf32>
    %cst_75 = arith.constant dense<0.000000e+00> : vector<2x96xf32>
    %420 = tpu.matmul %410, %93, %cst_75 {dimension_numbers = #tpu.dot_dimension_numbers<[1], [0], [0], [1], [0, 0, 1, 1], [], []>} : vector<2x32xf32>, vector<32x96xf32>, vector<2x96xf32> -> vector<2x96xf32>
    %421 = vector.broadcast %94 : vector<1x96xf32> to vector<2x96xf32>
    %422 = arith.addf %420, %421 : vector<2x96xf32>
    %423 = vector.extract_strided_slice %422 {offsets = [0, 0], sizes = [2, 32], strides = [1, 1]} : vector<2x96xf32> to vector<2x32xf32>
    %424 = arith.addf %413, %423 : vector<2x32xf32>
    %425 = arith.negf %424 : vector<2x32xf32>
    %426 = math.exp %425 : vector<2x32xf32>
    %cst_76 = arith.constant 1.000000e+00 : f32
    %427 = vector.broadcast %cst_76 : f32 to vector<2x32xf32>
    %428 = arith.addf %427, %426 : vector<2x32xf32>
    %429 = arith.divf %427, %428 : vector<2x32xf32>
    %430 = vector.extract_strided_slice %422 {offsets = [0, 32], sizes = [2, 32], strides = [1, 1]} : vector<2x96xf32> to vector<2x32xf32>
    %431 = arith.addf %416, %430 : vector<2x32xf32>
    %432 = arith.negf %431 : vector<2x32xf32>
    %433 = math.exp %432 : vector<2x32xf32>
    %cst_77 = arith.constant 1.000000e+00 : f32
    %434 = vector.broadcast %cst_77 : f32 to vector<2x32xf32>
    %435 = arith.addf %434, %433 : vector<2x32xf32>
    %436 = arith.divf %434, %435 : vector<2x32xf32>
    %437 = vector.extract_strided_slice %422 {offsets = [0, 64], sizes = [2, 32], strides = [1, 1]} : vector<2x96xf32> to vector<2x32xf32>
    %438 = arith.mulf %429, %437 : vector<2x32xf32>
    %439 = arith.addf %419, %438 : vector<2x32xf32>
    %440 = math.tanh %439 : vector<2x32xf32>
    %cst_78 = arith.constant 1.000000e+00 : f32
    %441 = vector.broadcast %cst_78 : f32 to vector<2x32xf32>
    %442 = arith.subf %441, %436 : vector<2x32xf32>
    %443 = arith.mulf %442, %440 : vector<2x32xf32>
    %444 = arith.mulf %436, %410 : vector<2x32xf32>
    %445 = arith.addf %443, %444 : vector<2x32xf32>
    %446 = vector.extract_strided_slice %90 {offsets = [10, 0], sizes = [1, 32], strides = [1, 1]} : vector<22x32xf32> to vector<1x32xf32>
    %447 = vector.extract_strided_slice %90 {offsets = [21, 0], sizes = [1, 32], strides = [1, 1]} : vector<22x32xf32> to vector<1x32xf32>
    %448 = tpu.concatenate %446, %447 in 0 : vector<1x32xf32>, vector<1x32xf32> -> vector<2x32xf32>
    %449 = vector.extract_strided_slice %91 {offsets = [10, 0], sizes = [1, 32], strides = [1, 1]} : vector<22x32xf32> to vector<1x32xf32>
    %450 = vector.extract_strided_slice %91 {offsets = [21, 0], sizes = [1, 32], strides = [1, 1]} : vector<22x32xf32> to vector<1x32xf32>
    %451 = tpu.concatenate %449, %450 in 0 : vector<1x32xf32>, vector<1x32xf32> -> vector<2x32xf32>
    %452 = vector.extract_strided_slice %92 {offsets = [10, 0], sizes = [1, 32], strides = [1, 1]} : vector<22x32xf32> to vector<1x32xf32>
    %453 = vector.extract_strided_slice %92 {offsets = [21, 0], sizes = [1, 32], strides = [1, 1]} : vector<22x32xf32> to vector<1x32xf32>
    %454 = tpu.concatenate %452, %453 in 0 : vector<1x32xf32>, vector<1x32xf32> -> vector<2x32xf32>
    %cst_79 = arith.constant dense<0.000000e+00> : vector<2x96xf32>
    %455 = tpu.matmul %445, %93, %cst_79 {dimension_numbers = #tpu.dot_dimension_numbers<[1], [0], [0], [1], [0, 0, 1, 1], [], []>} : vector<2x32xf32>, vector<32x96xf32>, vector<2x96xf32> -> vector<2x96xf32>
    %456 = vector.broadcast %94 : vector<1x96xf32> to vector<2x96xf32>
    %457 = arith.addf %455, %456 : vector<2x96xf32>
    %458 = vector.extract_strided_slice %457 {offsets = [0, 0], sizes = [2, 32], strides = [1, 1]} : vector<2x96xf32> to vector<2x32xf32>
    %459 = arith.addf %448, %458 : vector<2x32xf32>
    %460 = arith.negf %459 : vector<2x32xf32>
    %461 = math.exp %460 : vector<2x32xf32>
    %cst_80 = arith.constant 1.000000e+00 : f32
    %462 = vector.broadcast %cst_80 : f32 to vector<2x32xf32>
    %463 = arith.addf %462, %461 : vector<2x32xf32>
    %464 = arith.divf %462, %463 : vector<2x32xf32>
    %465 = vector.extract_strided_slice %457 {offsets = [0, 32], sizes = [2, 32], strides = [1, 1]} : vector<2x96xf32> to vector<2x32xf32>
    %466 = arith.addf %451, %465 : vector<2x32xf32>
    %467 = arith.negf %466 : vector<2x32xf32>
    %468 = math.exp %467 : vector<2x32xf32>
    %cst_81 = arith.constant 1.000000e+00 : f32
    %469 = vector.broadcast %cst_81 : f32 to vector<2x32xf32>
    %470 = arith.addf %469, %468 : vector<2x32xf32>
    %471 = arith.divf %469, %470 : vector<2x32xf32>
    %472 = vector.extract_strided_slice %457 {offsets = [0, 64], sizes = [2, 32], strides = [1, 1]} : vector<2x96xf32> to vector<2x32xf32>
    %473 = arith.mulf %464, %472 : vector<2x32xf32>
    %474 = arith.addf %454, %473 : vector<2x32xf32>
    %475 = math.tanh %474 : vector<2x32xf32>
    %cst_82 = arith.constant 1.000000e+00 : f32
    %476 = vector.broadcast %cst_82 : f32 to vector<2x32xf32>
    %477 = arith.subf %476, %471 : vector<2x32xf32>
    %478 = arith.mulf %477, %475 : vector<2x32xf32>
    %479 = arith.mulf %471, %445 : vector<2x32xf32>
    %480 = arith.addf %478, %479 : vector<2x32xf32>
    %481 = vector.extract_strided_slice %130 {offsets = [0, 0], sizes = [1, 32], strides = [1, 1]} : vector<2x32xf32> to vector<1x32xf32>
    %482 = vector.extract_strided_slice %165 {offsets = [0, 0], sizes = [1, 32], strides = [1, 1]} : vector<2x32xf32> to vector<1x32xf32>
    %483 = vector.extract_strided_slice %200 {offsets = [0, 0], sizes = [1, 32], strides = [1, 1]} : vector<2x32xf32> to vector<1x32xf32>
    %484 = vector.extract_strided_slice %235 {offsets = [0, 0], sizes = [1, 32], strides = [1, 1]} : vector<2x32xf32> to vector<1x32xf32>
    %485 = vector.extract_strided_slice %270 {offsets = [0, 0], sizes = [1, 32], strides = [1, 1]} : vector<2x32xf32> to vector<1x32xf32>
    %486 = vector.extract_strided_slice %305 {offsets = [0, 0], sizes = [1, 32], strides = [1, 1]} : vector<2x32xf32> to vector<1x32xf32>
    %487 = vector.extract_strided_slice %340 {offsets = [0, 0], sizes = [1, 32], strides = [1, 1]} : vector<2x32xf32> to vector<1x32xf32>
    %488 = vector.extract_strided_slice %375 {offsets = [0, 0], sizes = [1, 32], strides = [1, 1]} : vector<2x32xf32> to vector<1x32xf32>
    %489 = vector.extract_strided_slice %410 {offsets = [0, 0], sizes = [1, 32], strides = [1, 1]} : vector<2x32xf32> to vector<1x32xf32>
    %490 = vector.extract_strided_slice %445 {offsets = [0, 0], sizes = [1, 32], strides = [1, 1]} : vector<2x32xf32> to vector<1x32xf32>
    %491 = vector.extract_strided_slice %480 {offsets = [0, 0], sizes = [1, 32], strides = [1, 1]} : vector<2x32xf32> to vector<1x32xf32>
    %492 = tpu.concatenate %481, %482, %483, %484, %485, %486, %487, %488, %489, %490, %491 in 0 : vector<1x32xf32>, vector<1x32xf32>, vector<1x32xf32>, vector<1x32xf32>, vector<1x32xf32>, vector<1x32xf32>, vector<1x32xf32>, vector<1x32xf32>, vector<1x32xf32>, vector<1x32xf32>, vector<1x32xf32> -> vector<11x32xf32>
    %493 = vector.extract_strided_slice %130 {offsets = [1, 0], sizes = [1, 32], strides = [1, 1]} : vector<2x32xf32> to vector<1x32xf32>
    %494 = vector.extract_strided_slice %165 {offsets = [1, 0], sizes = [1, 32], strides = [1, 1]} : vector<2x32xf32> to vector<1x32xf32>
    %495 = vector.extract_strided_slice %200 {offsets = [1, 0], sizes = [1, 32], strides = [1, 1]} : vector<2x32xf32> to vector<1x32xf32>
    %496 = vector.extract_strided_slice %235 {offsets = [1, 0], sizes = [1, 32], strides = [1, 1]} : vector<2x32xf32> to vector<1x32xf32>
    %497 = vector.extract_strided_slice %270 {offsets = [1, 0], sizes = [1, 32], strides = [1, 1]} : vector<2x32xf32> to vector<1x32xf32>
    %498 = vector.extract_strided_slice %305 {offsets = [1, 0], sizes = [1, 32], strides = [1, 1]} : vector<2x32xf32> to vector<1x32xf32>
    %499 = vector.extract_strided_slice %340 {offsets = [1, 0], sizes = [1, 32], strides = [1, 1]} : vector<2x32xf32> to vector<1x32xf32>
    %500 = vector.extract_strided_slice %375 {offsets = [1, 0], sizes = [1, 32], strides = [1, 1]} : vector<2x32xf32> to vector<1x32xf32>
    %501 = vector.extract_strided_slice %410 {offsets = [1, 0], sizes = [1, 32], strides = [1, 1]} : vector<2x32xf32> to vector<1x32xf32>
    %502 = vector.extract_strided_slice %445 {offsets = [1, 0], sizes = [1, 32], strides = [1, 1]} : vector<2x32xf32> to vector<1x32xf32>
    %503 = vector.extract_strided_slice %480 {offsets = [1, 0], sizes = [1, 32], strides = [1, 1]} : vector<2x32xf32> to vector<1x32xf32>
    %504 = tpu.concatenate %493, %494, %495, %496, %497, %498, %499, %500, %501, %502, %503 in 0 : vector<1x32xf32>, vector<1x32xf32>, vector<1x32xf32>, vector<1x32xf32>, vector<1x32xf32>, vector<1x32xf32>, vector<1x32xf32>, vector<1x32xf32>, vector<1x32xf32>, vector<1x32xf32>, vector<1x32xf32> -> vector<11x32xf32>
    %505 = tpu.concatenate %492, %504 in 0 : vector<11x32xf32>, vector<11x32xf32> -> vector<22x32xf32>
    %c0_83 = arith.constant 0 : index
    %c0_84 = arith.constant 0 : index
    %506 = vector.load %arg8[%c0_83, %c0_84] : memref<32x32xf32, #tpu.memory_space<vmem>>, vector<32x32xf32>
    %cst_85 = arith.constant dense<0.000000e+00> : vector<22x32xf32>
    %507 = tpu.matmul %505, %506, %cst_85 {dimension_numbers = #tpu.dot_dimension_numbers<[1], [0], [0], [1], [0, 0, 1, 1], [], []>} : vector<22x32xf32>, vector<32x32xf32>, vector<22x32xf32> -> vector<22x32xf32>
    %c0_86 = arith.constant 0 : index
    %c0_87 = arith.constant 0 : index
    %508 = vector.load %arg9[%c0_86, %c0_87] : memref<1x32xf32, #tpu.memory_space<vmem>>, vector<1x32xf32>
    %509 = vector.broadcast %508 : vector<1x32xf32> to vector<22x32xf32>
    %510 = arith.addf %507, %509 : vector<22x32xf32>
    %c0_88 = arith.constant 0 : index
    %c0_89 = arith.constant 0 : index
    %511 = vector.load %arg10[%c0_88, %c0_89] : memref<32x32xf32, #tpu.memory_space<vmem>>, vector<32x32xf32>
    %cst_90 = arith.constant dense<0.000000e+00> : vector<22x32xf32>
    %512 = tpu.matmul %510, %511, %cst_90 {dimension_numbers = #tpu.dot_dimension_numbers<[1], [0], [0], [1], [0, 0, 1, 1], [], []>} : vector<22x32xf32>, vector<32x32xf32>, vector<22x32xf32> -> vector<22x32xf32>
    %c0_91 = arith.constant 0 : index
    %c0_92 = arith.constant 0 : index
    %513 = vector.load %arg11[%c0_91, %c0_92] : memref<1x32xf32, #tpu.memory_space<vmem>>, vector<1x32xf32>
    %514 = vector.broadcast %513 : vector<1x32xf32> to vector<22x32xf32>
    %515 = arith.addf %512, %514 : vector<22x32xf32>
    %516 = arith.negf %515 : vector<22x32xf32>
    %517 = math.exp %516 : vector<22x32xf32>
    %cst_93 = arith.constant 1.000000e+00 : f32
    %518 = vector.broadcast %cst_93 : f32 to vector<22x32xf32>
    %519 = arith.addf %518, %517 : vector<22x32xf32>
    %520 = arith.divf %518, %519 : vector<22x32xf32>
    %521 = arith.mulf %510, %520 : vector<22x32xf32>
    %522 = arith.addf %510, %521 : vector<22x32xf32>
    %c0_94 = arith.constant 0 : index
    %c0_95 = arith.constant 0 : index
    %523 = vector.load %arg12[%c0_94, %c0_95] : memref<32x32xf32, #tpu.memory_space<vmem>>, vector<32x32xf32>
    %cst_96 = arith.constant dense<0.000000e+00> : vector<22x32xf32>
    %524 = tpu.matmul %522, %523, %cst_96 {dimension_numbers = #tpu.dot_dimension_numbers<[1], [0], [0], [1], [0, 0, 1, 1], [], []>} : vector<22x32xf32>, vector<32x32xf32>, vector<22x32xf32> -> vector<22x32xf32>
    %c0_97 = arith.constant 0 : index
    %c0_98 = arith.constant 0 : index
    %525 = vector.load %arg13[%c0_97, %c0_98] : memref<1x32xf32, #tpu.memory_space<vmem>>, vector<1x32xf32>
    %526 = vector.broadcast %525 : vector<1x32xf32> to vector<22x32xf32>
    %527 = arith.addf %524, %526 : vector<22x32xf32>
    %528 = math.tanh %527 : vector<22x32xf32>
    %c0_99 = arith.constant 0 : index
    %c0_100 = arith.constant 0 : index
    %529 = vector.load %arg14[%c0_99, %c0_100] : memref<1x32xf32, #tpu.memory_space<vmem>>, vector<1x32xf32>
    %530 = vector.broadcast %529 : vector<1x32xf32> to vector<22x32xf32>
    %531 = arith.mulf %528, %530 : vector<22x32xf32>
    %cst_101 = arith.constant dense<0.000000e+00> : vector<22xf32>
    %532 = vector.multi_reduction <add>, %531, %cst_101 [1] : vector<22x32xf32> to vector<22xf32>
    %533 = vector.shape_cast %532 : vector<22xf32> to vector<22x1xf32>
    %534 = vector.extract_strided_slice %533 {offsets = [0, 0], sizes = [11, 1], strides = [1, 1]} : vector<22x1xf32> to vector<11x1xf32>
    %535 = vector.extract_strided_slice %522 {offsets = [0, 0], sizes = [11, 32], strides = [1, 1]} : vector<22x32xf32> to vector<11x32xf32>
    %cst_102 = arith.constant dense<0xFF800000> : vector<1xf32>
    %536 = vector.multi_reduction <maximumf>, %534, %cst_102 [0] : vector<11x1xf32> to vector<1xf32>
    %cst_103 = arith.constant 0xFF800000 : f32
    %537 = vector.broadcast %cst_103 : f32 to vector<1xf32>
    %538 = arith.maximumf %537, %536 : vector<1xf32>
    %539 = vector.shape_cast %538 : vector<1xf32> to vector<1x1xf32>
    %540 = vector.broadcast %539 : vector<1x1xf32> to vector<11x1xf32>
    %541 = arith.subf %534, %540 : vector<11x1xf32>
    %542 = math.exp %541 : vector<11x1xf32>
    %cst_104 = arith.constant dense<0.000000e+00> : vector<1xf32>
    %543 = vector.multi_reduction <add>, %542, %cst_104 [0] : vector<11x1xf32> to vector<1xf32>
    %544 = vector.shape_cast %543 : vector<1xf32> to vector<1x1xf32>
    %545 = vector.broadcast %544 : vector<1x1xf32> to vector<11x1xf32>
    %546 = arith.divf %542, %545 : vector<11x1xf32>
    %547 = vector.broadcast %546 : vector<11x1xf32> to vector<11x32xf32>
    %548 = arith.mulf %535, %547 : vector<11x32xf32>
    %cst_105 = arith.constant dense<0.000000e+00> : vector<32xf32>
    %549 = vector.multi_reduction <add>, %548, %cst_105 [0] : vector<11x32xf32> to vector<32xf32>
    %550 = vector.shape_cast %549 : vector<32xf32> to vector<1x32xf32>
    %551 = vector.extract_strided_slice %533 {offsets = [11, 0], sizes = [11, 1], strides = [1, 1]} : vector<22x1xf32> to vector<11x1xf32>
    %552 = vector.extract_strided_slice %522 {offsets = [11, 0], sizes = [11, 32], strides = [1, 1]} : vector<22x32xf32> to vector<11x32xf32>
    %cst_106 = arith.constant dense<0xFF800000> : vector<1xf32>
    %553 = vector.multi_reduction <maximumf>, %551, %cst_106 [0] : vector<11x1xf32> to vector<1xf32>
    %cst_107 = arith.constant 0xFF800000 : f32
    %554 = vector.broadcast %cst_107 : f32 to vector<1xf32>
    %555 = arith.maximumf %554, %553 : vector<1xf32>
    %556 = vector.shape_cast %555 : vector<1xf32> to vector<1x1xf32>
    %557 = vector.broadcast %556 : vector<1x1xf32> to vector<11x1xf32>
    %558 = arith.subf %551, %557 : vector<11x1xf32>
    %559 = math.exp %558 : vector<11x1xf32>
    %cst_108 = arith.constant dense<0.000000e+00> : vector<1xf32>
    %560 = vector.multi_reduction <add>, %559, %cst_108 [0] : vector<11x1xf32> to vector<1xf32>
    %561 = vector.shape_cast %560 : vector<1xf32> to vector<1x1xf32>
    %562 = vector.broadcast %561 : vector<1x1xf32> to vector<11x1xf32>
    %563 = arith.divf %559, %562 : vector<11x1xf32>
    %564 = vector.broadcast %563 : vector<11x1xf32> to vector<11x32xf32>
    %565 = arith.mulf %552, %564 : vector<11x32xf32>
    %cst_109 = arith.constant dense<0.000000e+00> : vector<32xf32>
    %566 = vector.multi_reduction <add>, %565, %cst_109 [0] : vector<11x32xf32> to vector<32xf32>
    %567 = vector.shape_cast %566 : vector<32xf32> to vector<1x32xf32>
    %568 = tpu.concatenate %550, %567 in 0 : vector<1x32xf32>, vector<1x32xf32> -> vector<2x32xf32>
    %c0_110 = arith.constant 0 : index
    %c0_111 = arith.constant 0 : index
    %569 = vector.load %arg15[%c0_110, %c0_111] : memref<32x10xf32, #tpu.memory_space<vmem>>, vector<32x10xf32>
    %cst_112 = arith.constant dense<0.000000e+00> : vector<2x10xf32>
    %570 = tpu.matmul %568, %569, %cst_112 {dimension_numbers = #tpu.dot_dimension_numbers<[1], [0], [0], [1], [0, 0, 1, 1], [], []>} : vector<2x32xf32>, vector<32x10xf32>, vector<2x10xf32> -> vector<2x10xf32>
    %c0_113 = arith.constant 0 : index
    %c0_114 = arith.constant 0 : index
    %571 = vector.load %arg16[%c0_113, %c0_114] : memref<1x10xf32, #tpu.memory_space<vmem>>, vector<1x10xf32>
    %572 = vector.broadcast %571 : vector<1x10xf32> to vector<2x10xf32>
    %573 = arith.addf %570, %572 : vector<2x10xf32>
    %c0_115 = arith.constant 0 : index
    %c0_116 = arith.constant 0 : index
    %574 = vector.load %arg17[%c0_115, %c0_116] : memref<2x10xf32, #tpu.memory_space<vmem>>, vector<2x10xf32>
    tpu.vector_store %arg17[%c0_115, %c0_116], %573 {strides = array<i32>} : memref<2x10xf32, #tpu.memory_space<vmem>>, vector<2x10xf32>,
    return
  }
  func.func @transform_0(%arg0: i32) -> (i32, i32, i32) {
    %c0_i32 = arith.constant 0 : i32
    %c0_i32_0 = arith.constant 0 : i32
    %c0_i32_1 = arith.constant 0 : i32
    %c0_i32_2 = arith.constant 0 : i32
    return %c0_i32, %c0_i32_0, %c0_i32_1 : i32, i32, i32
  }
  func.func @transform_1(%arg0: i32) -> (i32, i32) {
    %c0_i32 = arith.constant 0 : i32
    %c0_i32_0 = arith.constant 0 : i32
    %c0_i32_1 = arith.constant 0 : i32
    return %c0_i32, %c0_i32_0 : i32, i32
  }
  func.func @transform_2(%arg0: i32) -> (i32, i32) {
    %c0_i32 = arith.constant 0 : i32
    %c0_i32_0 = arith.constant 0 : i32
    %c0_i32_1 = arith.constant 0 : i32
    return %c0_i32, %c0_i32_0 : i32, i32
  }
  func.func @transform_3(%arg0: i32) -> (i32, i32) {
    %c0_i32 = arith.constant 0 : i32
    %c0_i32_0 = arith.constant 0 : i32
    %c0_i32_1 = arith.constant 0 : i32
    return %c0_i32, %c0_i32_0 : i32, i32
  }
  func.func @transform_4(%arg0: i32) -> (i32, i32) {
    %c0_i32 = arith.constant 0 : i32
    %c0_i32_0 = arith.constant 0 : i32
    %c0_i32_1 = arith.constant 0 : i32
    return %c0_i32, %c0_i32_0 : i32, i32
  }
  func.func @transform_5(%arg0: i32) -> (i32, i32) {
    %c0_i32 = arith.constant 0 : i32
    %c0_i32_0 = arith.constant 0 : i32
    %c0_i32_1 = arith.constant 0 : i32
    return %c0_i32, %c0_i32_0 : i32, i32
  }
  func.func @transform_6(%arg0: i32) -> (i32, i32) {
    %c0_i32 = arith.constant 0 : i32
    %c0_i32_0 = arith.constant 0 : i32
    %c0_i32_1 = arith.constant 0 : i32
    return %c0_i32, %c0_i32_0 : i32, i32
  }
  func.func @transform_7(%arg0: i32) -> (i32, i32) {
    %c0_i32 = arith.constant 0 : i32
    %c0_i32_0 = arith.constant 0 : i32
    %c0_i32_1 = arith.constant 0 : i32
    return %c0_i32, %c0_i32_0 : i32, i32
  }
  func.func @transform_8(%arg0: i32) -> (i32, i32) {
    %c0_i32 = arith.constant 0 : i32
    %c0_i32_0 = arith.constant 0 : i32
    %c0_i32_1 = arith.constant 0 : i32
    return %c0_i32, %c0_i32_0 : i32, i32
  }
  func.func @transform_9(%arg0: i32) -> (i32, i32) {
    %c0_i32 = arith.constant 0 : i32
    %c0_i32_0 = arith.constant 0 : i32
    %c0_i32_1 = arith.constant 0 : i32
    return %c0_i32, %c0_i32_0 : i32, i32
  }
  func.func @transform_10(%arg0: i32) -> (i32, i32) {
    %c0_i32 = arith.constant 0 : i32
    %c0_i32_0 = arith.constant 0 : i32
    %c0_i32_1 = arith.constant 0 : i32
    return %c0_i32, %c0_i32_0 : i32, i32
  }
  func.func @transform_11(%arg0: i32) -> (i32, i32) {
    %c0_i32 = arith.constant 0 : i32
    %c0_i32_0 = arith.constant 0 : i32
    %c0_i32_1 = arith.constant 0 : i32
    return %c0_i32, %c0_i32_0 : i32, i32
  }
  func.func @transform_12(%arg0: i32) -> (i32, i32) {
    %c0_i32 = arith.constant 0 : i32
    %c0_i32_0 = arith.constant 0 : i32
    %c0_i32_1 = arith.constant 0 : i32
    return %c0_i32, %c0_i32_0 : i32, i32
  }
  func.func @transform_13(%arg0: i32) -> (i32, i32) {
    %c0_i32 = arith.constant 0 : i32
    %c0_i32_0 = arith.constant 0 : i32
    %c0_i32_1 = arith.constant 0 : i32
    return %c0_i32, %c0_i32_0 : i32, i32
  }
  func.func @transform_14(%arg0: i32) -> (i32, i32) {
    %c0_i32 = arith.constant 0 : i32
    %c0_i32_0 = arith.constant 0 : i32
    %c0_i32_1 = arith.constant 0 : i32
    return %c0_i32, %c0_i32_0 : i32, i32
  }
  func.func @transform_15(%arg0: i32) -> (i32, i32) {
    %c0_i32 = arith.constant 0 : i32
    %c0_i32_0 = arith.constant 0 : i32
    %c0_i32_1 = arith.constant 0 : i32
    return %c0_i32, %c0_i32_0 : i32, i32
  }
  func.func @transform_16(%arg0: i32) -> (i32, i32) {
    %c0_i32 = arith.constant 0 : i32
    %c0_i32_0 = arith.constant 0 : i32
    %c0_i32_1 = arith.constant 0 : i32
    return %c0_i32, %c0_i32_0 : i32, i32
  }
}

</mosaic_0001>

<llo_original>
// kernel: reverse
$region0: #{reverse}
  %s0 = inlined_call_operand.vmem [shape: f32[2,256], index: 0, kind: input, shape index: {}]
  %s1 = inlined_call_operand.vmem [shape: f32[2,256], index: 1, kind: output, shape index: {}]
  %v2 = vlaneseq
  %v3 = vsub.s32 127, %v2
  %4 = vset.pattern.permute.xlu0 %v3
  $region1: #{reverse} parent=0
    #allocation0 [shape = 'u8[4096]{0}', space=vmem, size = 0x1000, scoped, tag = 'operand span for operand 0']
    #allocation1 [shape = 'u8[2048]{0}', space=vmem, size = 0x800, scoped, tag = 'packed  for operand 0']
    #allocation2 [shape = 'u8[4096]{0}', space=vmem, size = 0x1000, scoped, tag = 'operand span for operand 1']
    #allocation3 [shape = 'u8[2048]{0}', space=vmem, size = 0x800, scoped, tag = 'packed  for operand 1']
    loop: start=0, step=1, limit=4
    $region2: #{reverse} parent=1 // loop_pre_header
      _
    $region3: #{reverse} parent=1 // loop_header
      %s6 = sphi 0, %s10
      %p7 = scmp.ge.s32.totalorder %s6, 4
      %s13 = sphi 0, %s25
      %s14 = sphi 0, %s21
      %s15 = sphi 0, %s13
      %s16 = sphi 0, %s14
      %s17 = sphi 0, %s15
      %s18 = sphi 0, %s16
    $region4: #{reverse} parent=1 // loop_header_branch
      %9 = sbr.rel (%p7) target = $region8
    $region5: #{reverse} parent=1 // loop_body
      %s11 = ssub.s32 %s6, 1
      %s12 = ssub.s32 %s6, 2
      %s19 = sadd.s32 1, %s14
      %p20 = scmp.ge.s32.totalorder %s19, 2
      %s21 = scalar_select %p20, 0, %s19
      %s22 = sadd.s32 1, %s13
      %s23 = scalar_select %p20, %s22, %s13
      %p24 = scmp.ge.s32.totalorder %s23, 1
      %s25 = scalar_select %p24, 0, %s23
      %p26 = scmp.le.s32.totalorder 1, %s6
      %p27 = scmp.lt.s32.totalorder %s6, 3
      %p28 = pnand %p26, %p27
      %p29 = pneg %p28
      // Predicated region
      $region9: #{reverse} parent=5 // pred_check
        _
      $region10: #{reverse} parent=5 // pred_check_branch
        %31 = sbr.rel (%p28) target = $region12
      $region11: #{reverse} parent=5 // pred_region
        %s32 = ssub.s32 %s6, 1
      $region12: #{reverse} parent=5 // pred_fallthru
        _
      %p33 = scmp.lt.s32.totalorder %s6, 2
      // Predicated region
      $region13: #{reverse} parent=5 // pred_check
        %p34 = pneg %p33
      $region14: #{reverse} parent=5 // pred_check_branch
        %36 = sbr.rel (%p34) target = $region16
      $region15: #{reverse} parent=5 // pred_region
        %s37 = sand.u32 %s6, 1
        %s38 = sand.u32 %s6, 1
        %s39 = smul.addr %s38, 2
        %s40 = scalar_lea.vmem [#allocation1], %s39
        %s41 = ssub.s32 1, %s14
        %s42 = smul.addr %s13, 2
        %s43 = sadd.s32 %s41, %s42
        %s44 = smul.addr %s43, 2
        %s45 = scalar_lea.vmem %s0, %s44
        // Predicated region
        $region17: #{reverse} parent=15 // pred_check
          _
        $region18: #{reverse} parent=15 // pred_check_branch
          %47 = sbr.rel (0) target = $region20
        $region19: #{reverse} parent=15 // pred_region
          // Predicated region
          $region21: #{reverse} parent=19 // pred_check
            _
          $region22: #{reverse} parent=19 // pred_check_branch
            %49 = sbr.rel target = $region24
          $region23: #{reverse} parent=19 // pred_region
            // Predicated region
            $region36: #{reverse} parent=23 // pred_check
              _
            $region37: #{reverse} parent=23 // pred_check_branch
              %65 = sbr.rel (0) target = $region39
            $region38: #{reverse} parent=23 // pred_region
              %s67 = ssub.s32 4, 1
              loop: start=0, step=1, limit=1
              $region40: #{reverse} parent=38 // loop_pre_header
                _
              $region41: #{reverse} parent=38 // loop_header
                %s69 = sphi 0, %s73
                %p70 = scmp.ge.s32.totalorder %s69, 1
                %s74 = sphi %s45, %s45
                %s75 = sphi %s40, %s40
              $region42: #{reverse} parent=38 // loop_header_branch
                %72 = sbr.rel (%p70) target = $region46
              $region43: #{reverse} parent=38 // loop_body
                %v76 = vld [vmem:[%s74] sm:%s67]
                %77 = vst [vmem:[%s75] sm:%s67] %v76
              $region44: #{reverse} parent=38 // loop_footer
                %s73 = sadd.s32 1, %s69
              $region45: #{reverse} parent=38 // loop_footer_branch
                %68 = sbr.rel target = $region41
              $region46: #{reverse} parent=38 // loop_exit
                _
            $region39: #{reverse} parent=23 // pred_fallthru
              _
          $region24: #{reverse} parent=19 // pred_fallthru
            _
          // Predicated region
          $region25: #{reverse} parent=19 // pred_check
            _
          $region26: #{reverse} parent=19 // pred_check_branch
            %51 = sbr.rel (0) target = $region28
          $region27: #{reverse} parent=19 // pred_region
            %s53 = ssub.s32 4, 1
            loop: start=0, step=1, limit=1
            $region29: #{reverse} parent=27 // loop_pre_header
              _
            $region30: #{reverse} parent=27 // loop_header
              %s55 = sphi 0, %s59
              %p56 = scmp.ge.s32.totalorder %s55, 1
              %s60 = sphi %s45, %s45
              %s61 = sphi %s40, %s40
            $region31: #{reverse} parent=27 // loop_header_branch
              %58 = sbr.rel (%p56) target = $region35
            $region32: #{reverse} parent=27 // loop_body
              %v62 = vld [vmem:[%s60] sm:%s53]
              %63 = vst [vmem:[%s61] sm:%s53] %v62
            $region33: #{reverse} parent=27 // loop_footer
              %s59 = sadd.s32 1, %s55
            $region34: #{reverse} parent=27 // loop_footer_branch
              %54 = sbr.rel target = $region30
            $region35: #{reverse} parent=27 // loop_exit
              _
          $region28: #{reverse} parent=19 // pred_fallthru
            _
        $region20: #{reverse} parent=15 // pred_fallthru
          _
        %78 = vnop
      $region16: #{reverse} parent=5 // pred_fallthru
        _
      %p79 = scmp.le.s32.totalorder 1, %s6
      %p80 = scmp.lt.s32.totalorder %s6, 3
      %p81 = pnand %p79, %p80
      %p82 = pneg %p81
      // Predicated region
      $region47: #{reverse} parent=5 // pred_check
        _
      $region48: #{reverse} parent=5 // pred_check_branch
        %84 = sbr.rel (%p81) target = $region50
      $region49: #{reverse} parent=5 // pred_region
        %s85 = ssub.s32 %s6, 1
        %s86 = sand.u32 %s11, 1
        %s87 = sand.u32 %s11, 1
        %s88 = smul.addr %s87, 2
        %s89 = scalar_lea.vmem [#allocation1], %s88
        %s90 = sand.u32 %s11, 1
        %s91 = sand.u32 %s11, 1
        %s92 = smul.addr %s91, 2
        %s93 = scalar_lea.vmem [#allocation1], %s92
        %s94 = sand.u32 %s11, 1
        %s95 = sand.u32 %s11, 1
        %s96 = smul.addr %s95, 2
        %s97 = scalar_lea.vmem [#allocation3], %s96
        %s99 = ssub.s32 4, 1
        %v100 = vld [vmem:[%s93] sm:%s99]
        %101 = vst [vmem:[#allocation0] sm:%s99] %v100
        %s102 = ssub.s32 1, %s16
        %v103 = vld [vmem:[#allocation0] sm:$0xff]
        %104 = vperm.xlu0 %4, %v103
        %v105 = vpop.permute.xlu0 %104
        %106 = vst [vmem:[#allocation2] sm:$0xff] %v105
        %s108 = ssub.s32 4, 1
        %v109 = vld [vmem:[#allocation2] sm:%s108]
        %s111 = ssub.s32 4, 1
        %112 = vst [vmem:[%s97] sm:%s111] %v109
        %s113 = sand.u32 %s11, 1
        %s114 = sand.u32 %s11, 1
        %s115 = smul.addr %s114, 2
        %s116 = scalar_lea.vmem [#allocation3], %s115
        %s117 = smul.addr %s15, 2
        %s118 = sadd.s32 %s16, %s117
        %s119 = smul.addr %s118, 2
        %s120 = scalar_lea.vmem %s1, %s119
        // Predicated region
        $region51: #{reverse} parent=49 // pred_check
          _
        $region52: #{reverse} parent=49 // pred_check_branch
          %122 = sbr.rel (0) target = $region54
        $region53: #{reverse} parent=49 // pred_region
          // Predicated region
          $region55: #{reverse} parent=53 // pred_check
            _
          $region56: #{reverse} parent=53 // pred_check_branch
            %124 = sbr.rel target = $region58
          $region57: #{reverse} parent=53 // pred_region
            // Predicated region
            $region70: #{reverse} parent=57 // pred_check
              _
            $region71: #{reverse} parent=57 // pred_check_branch
              %140 = sbr.rel (0) target = $region73
            $region72: #{reverse} parent=57 // pred_region
              %s142 = ssub.s32 4, 1
              loop: start=0, step=1, limit=1
              $region74: #{reverse} parent=72 // loop_pre_header
                _
              $region75: #{reverse} parent=72 // loop_header
                %s144 = sphi 0, %s148
                %p145 = scmp.ge.s32.totalorder %s144, 1
                %s149 = sphi %s116, %s116
                %s150 = sphi %s120, %s120
              $region76: #{reverse} parent=72 // loop_header_branch
                %147 = sbr.rel (%p145) target = $region80
              $region77: #{reverse} parent=72 // loop_body
                %v151 = vld [vmem:[%s149] sm:%s142]
                %152 = vst [vmem:[%s150] sm:%s142] %v151
              $region78: #{reverse} parent=72 // loop_footer
                %s148 = sadd.s32 1, %s144
              $region79: #{reverse} parent=72 // loop_footer_branch
                %143 = sbr.rel target = $region75
              $region80: #{reverse} parent=72 // loop_exit
                _
            $region73: #{reverse} parent=57 // pred_fallthru
              _
          $region58: #{reverse} parent=53 // pred_fallthru
            _
          // Predicated region
          $region59: #{reverse} parent=53 // pred_check
            _
          $region60: #{reverse} parent=53 // pred_check_branch
            %126 = sbr.rel (0) target = $region62
          $region61: #{reverse} parent=53 // pred_region
            %s128 = ssub.s32 4, 1
            loop: start=0, step=1, limit=1
            $region63: #{reverse} parent=61 // loop_pre_header
              _
            $region64: #{reverse} parent=61 // loop_header
              %s130 = sphi 0, %s134
              %p131 = scmp.ge.s32.totalorder %s130, 1
              %s135 = sphi %s116, %s116
              %s136 = sphi %s120, %s120
            $region65: #{reverse} parent=61 // loop_header_branch
              %133 = sbr.rel (%p131) target = $region69
            $region66: #{reverse} parent=61 // loop_body
              %v137 = vld [vmem:[%s135] sm:%s128]
              %138 = vst [vmem:[%s136] sm:%s128] %v137
            $region67: #{reverse} parent=61 // loop_footer
              %s134 = sadd.s32 1, %s130
            $region68: #{reverse} parent=61 // loop_footer_branch
              %129 = sbr.rel target = $region64
            $region69: #{reverse} parent=61 // loop_exit
              _
          $region62: #{reverse} parent=53 // pred_fallthru
            _
        $region54: #{reverse} parent=49 // pred_fallthru
          _
        %153 = vnop
      $region50: #{reverse} parent=5 // pred_fallthru
        _
      %p154 = scmp.le.s32.totalorder 2, %s6
      // Predicated region
      $region81: #{reverse} parent=5 // pred_check
        %p155 = pneg %p154
      $region82: #{reverse} parent=5 // pred_check_branch
        %157 = sbr.rel (%p155) target = $region84
      $region83: #{reverse} parent=5 // pred_region
        %s158 = ssub.s32 %s6, 2
        %s159 = sand.u32 %s12, 1
        %s160 = sand.u32 %s12, 1
        %s161 = smul.addr %s160, 2
        %s162 = scalar_lea.vmem [#allocation3], %s161
      $region84: #{reverse} parent=5 // pred_fallthru
        _
    $region6: #{reverse} parent=1 // loop_footer
      %s10 = sadd.s32 1, %s6
    $region7: #{reverse} parent=1 // loop_footer_branch
      %5 = sbr.rel target = $region3
    $region8: #{reverse} parent=1 // loop_exit
      _

// kernel: improved_phi_fc_forward.1
$region0: #{improved_phi_fc_forward.1}
  #allocation0 [shape = 'u32[]', space=smem, size = 0x4, offset = 0x4, fixed_abs, tag = 'smem constant byte address 0x4 - core index']
  #allocation1 [shape = 'u32[72,128]{1,0:T(1,128)}', space=vmem, size = 0x9000, scoped, tag = 'internal scratch']
  %s0 = inlined_call_operand.vmem [shape: f32[2,11,64], index: 0, kind: input, shape index: {}]
  %s1 = inlined_call_operand.vmem [shape: f32[64,64], index: 1, kind: input, shape index: {}]
  %s2 = inlined_call_operand.vmem [shape: f32[1,64], index: 2, kind: input, shape index: {}]
  %s3 = inlined_call_operand.vmem [shape: f32[32,96], index: 3, kind: input, shape index: {}]
  %s4 = inlined_call_operand.vmem [shape: f32[1,96], index: 4, kind: input, shape index: {}]
  %s5 = inlined_call_operand.vmem [shape: f32[32,96], index: 5, kind: input, shape index: {}]
  %s6 = inlined_call_operand.vmem [shape: f32[1,96], index: 6, kind: input, shape index: {}]
  %s7 = inlined_call_operand.vmem [shape: f32[32,32], index: 7, kind: input, shape index: {}]
  %s8 = inlined_call_operand.vmem [shape: f32[1,32], index: 8, kind: input, shape index: {}]
  %s9 = inlined_call_operand.vmem [shape: f32[32,32], index: 9, kind: input, shape index: {}]
  %s10 = inlined_call_operand.vmem [shape: f32[1,32], index: 10, kind: input, shape index: {}]
  %s11 = inlined_call_operand.vmem [shape: f32[32,32], index: 11, kind: input, shape index: {}]
  %s12 = inlined_call_operand.vmem [shape: f32[1,32], index: 12, kind: input, shape index: {}]
  %s13 = inlined_call_operand.vmem [shape: f32[1,32], index: 13, kind: input, shape index: {}]
  %s14 = inlined_call_operand.vmem [shape: f32[32,10], index: 14, kind: input, shape index: {}]
  %s15 = inlined_call_operand.vmem [shape: f32[1,10], index: 15, kind: input, shape index: {}]
  %s16 = inlined_call_operand.hbm [shape: f32[2,10], index: 16, kind: output, shape index: {}]
  %s17 = sld [smem:[#allocation0]]
  $region74: #{improved_phi_fc_forward.1} parent=0
    _
  %s19 = ssub.s32 1, %s17
  %s20 = scalar_select 0, %s19, %s17
  $region1: #{improved_phi_fc_forward.1} parent=0
    #allocation2 [shape = 'u8[1024]{0}', space=vmem, size = 0x400, scoped, tag = 'output window, operand 0, single buffered']
    #allocation3 [shape = 's32[1]{0}', space=sflag, size = 0x4, scoped, tag = 'scoped memory for improved_phi_fc_forward.1']
    %21 = vsyncpa [#allocation3], 0
    // Predicated region
    $region2: #{improved_phi_fc_forward.1} parent=1 // pred_check
      _
    $region3: #{improved_phi_fc_forward.1} parent=1 // pred_check_branch
      %23 = sbr.rel (0) target = $region5
    $region4: #{improved_phi_fc_forward.1} parent=1 // pred_region
      _
    $region5: #{improved_phi_fc_forward.1} parent=1 // pred_fallthru
      _
    // Predicated region
    $region6: #{improved_phi_fc_forward.1} parent=1 // pred_check
      _
    $region7: #{improved_phi_fc_forward.1} parent=1 // pred_check_branch
      %25 = sbr.rel (0) target = $region9
    $region8: #{improved_phi_fc_forward.1} parent=1 // pred_region
      _
    $region9: #{improved_phi_fc_forward.1} parent=1 // pred_fallthru
      _
    // Predicated region
    $region10: #{improved_phi_fc_forward.1} parent=1 // pred_check
      _
    $region11: #{improved_phi_fc_forward.1} parent=1 // pred_check_branch
      %27 = sbr.rel (0) target = $region13
    $region12: #{improved_phi_fc_forward.1} parent=1 // pred_region
      _
    $region13: #{improved_phi_fc_forward.1} parent=1 // pred_fallthru
      _
    // Predicated region
    $region14: #{improved_phi_fc_forward.1} parent=1 // pred_check
      _
    $region15: #{improved_phi_fc_forward.1} parent=1 // pred_check_branch
      %29 = sbr.rel (0) target = $region17
    $region16: #{improved_phi_fc_forward.1} parent=1 // pred_region
      _
    $region17: #{improved_phi_fc_forward.1} parent=1 // pred_fallthru
      _
    // Predicated region
    $region18: #{improved_phi_fc_forward.1} parent=1 // pred_check
      _
    $region19: #{improved_phi_fc_forward.1} parent=1 // pred_check_branch
      %31 = sbr.rel (0) target = $region21
    $region20: #{improved_phi_fc_forward.1} parent=1 // pred_region
      _
    $region21: #{improved_phi_fc_forward.1} parent=1 // pred_fallthru
      _
    // Predicated region
    $region22: #{improved_phi_fc_forward.1} parent=1 // pred_check
      _
    $region23: #{improved_phi_fc_forward.1} parent=1 // pred_check_branch
      %33 = sbr.rel (0) target = $region25
    $region24: #{improved_phi_fc_forward.1} parent=1 // pred_region
      _
    $region25: #{improved_phi_fc_forward.1} parent=1 // pred_fallthru
      _
    // Predicated region
    $region26: #{improved_phi_fc_forward.1} parent=1 // pred_check
      _
    $region27: #{improved_phi_fc_forward.1} parent=1 // pred_check_branch
      %35 = sbr.rel (0) target = $region29
    $region28: #{improved_phi_fc_forward.1} parent=1 // pred_region
      _
    $region29: #{improved_phi_fc_forward.1} parent=1 // pred_fallthru
      _
    // Predicated region
    $region30: #{improved_phi_fc_forward.1} parent=1 // pred_check
      _
    $region31: #{improved_phi_fc_forward.1} parent=1 // pred_check_branch
      %37 = sbr.rel (0) target = $region33
    $region32: #{improved_phi_fc_forward.1} parent=1 // pred_region
      _
    $region33: #{improved_phi_fc_forward.1} parent=1 // pred_fallthru
      _
    // Predicated region
    $region34: #{improved_phi_fc_forward.1} parent=1 // pred_check
      _
    $region35: #{improved_phi_fc_forward.1} parent=1 // pred_check_branch
      %39 = sbr.rel (0) target = $region37
    $region36: #{improved_phi_fc_forward.1} parent=1 // pred_region
      _
    $region37: #{improved_phi_fc_forward.1} parent=1 // pred_fallthru
      _
    // Predicated region
    $region38: #{improved_phi_fc_forward.1} parent=1 // pred_check
      _
    $region39: #{improved_phi_fc_forward.1} parent=1 // pred_check_branch
      %41 = sbr.rel (0) target = $region41
    $region40: #{improved_phi_fc_forward.1} parent=1 // pred_region
      _
    $region41: #{improved_phi_fc_forward.1} parent=1 // pred_fallthru
      _
    // Predicated region
    $region42: #{improved_phi_fc_forward.1} parent=1 // pred_check
      _
    $region43: #{improved_phi_fc_forward.1} parent=1 // pred_check_branch
      %43 = sbr.rel (0) target = $region45
    $region44: #{improved_phi_fc_forward.1} parent=1 // pred_region
      _
    $region45: #{improved_phi_fc_forward.1} parent=1 // pred_fallthru
      _
    // Predicated region
    $region46: #{improved_phi_fc_forward.1} parent=1 // pred_check
      _
    $region47: #{improved_phi_fc_forward.1} parent=1 // pred_check_branch
      %45 = sbr.rel (0) target = $region49
    $region48: #{improved_phi_fc_forward.1} parent=1 // pred_region
      _
    $region49: #{improved_phi_fc_forward.1} parent=1 // pred_fallthru
      _
    // Predicated region
    $region50: #{improved_phi_fc_forward.1} parent=1 // pred_check
      _
    $region51: #{improved_phi_fc_forward.1} parent=1 // pred_check_branch
      %47 = sbr.rel (0) target = $region53
    $region52: #{improved_phi_fc_forward.1} parent=1 // pred_region
      _
    $region53: #{improved_phi_fc_forward.1} parent=1 // pred_fallthru
      _
    // Predicated region
    $region54: #{improved_phi_fc_forward.1} parent=1 // pred_check
      _
    $region55: #{improved_phi_fc_forward.1} parent=1 // pred_check_branch
      %49 = sbr.rel (0) target = $region57
    $region56: #{improved_phi_fc_forward.1} parent=1 // pred_region
      _
    $region57: #{improved_phi_fc_forward.1} parent=1 // pred_fallthru
      _
    // Predicated region
    $region58: #{improved_phi_fc_forward.1} parent=1 // pred_check
      _
    $region59: #{improved_phi_fc_forward.1} parent=1 // pred_check_branch
      %51 = sbr.rel (0) target = $region61
    $region60: #{improved_phi_fc_forward.1} parent=1 // pred_region
      _
    $region61: #{improved_phi_fc_forward.1} parent=1 // pred_fallthru
      _
    // Predicated region
    $region62: #{improved_phi_fc_forward.1} parent=1 // pred_check
      _
    $region63: #{improved_phi_fc_forward.1} parent=1 // pred_check_branch
      %53 = sbr.rel (0) target = $region65
    $region64: #{improved_phi_fc_forward.1} parent=1 // pred_region
      _
    $region65: #{improved_phi_fc_forward.1} parent=1 // pred_fallthru
      _
    %v54 = vld [vmem:[%s0] sm:$0xff]
    %v55 = vld [vmem:[%s0 + $0x8] sm:$0x7]
    %v56 = vmax.f32 %v54, 1e-10
    %v57 = vmax.f32 %v55, 1e-10
    %v58 = vlog2.pop %v56
    %v59 = vmul.f32 %v58, 0.6931472
    %v60 = vlog2.pop %v57
    %v61 = vmul.f32 %v60, 0.6931472
    %v62 = vmul.f32 %v59, 0.4342945
    %v63 = vmul.f32 %v61, 0.4342945
    %v64 = vmul.f32 %v62, 10.0
    %v65 = vmul.f32 %v63, 10.0
    %vm66 = vcmask 523264
    %v67 = vsel %vm66, %v64, 0.0
    %vm68 = vcmask 518144
    %v69 = vsel %vm68, %v65, 0.0
    %v70 = vadd.f32 %v67, %v69
    %71 = vadd.xlane.f32.xlu0 %v70
    %v72 = vpop.xlane.xlu0 %71
    %v73 = vrot.slane %v72, 4
    %v74 = vadd.f32 %v72, %v73
    %v75 = vrot.slane %v74, 2
    %v76 = vadd.f32 %v74, %v75
    %v77 = vrot.slane %v76, 1
    %v78 = vadd.f32 %v76, %v77
    %s79 = vtos %v78
    %v80 = vstv %s79
    %v81 = vmul.f32 %v64, %v64
    %v82 = vmul.f32 %v65, %v65
    %v83 = vsel %vm66, %v81, 0.0
    %v84 = vsel %vm68, %v82, 0.0
    %v85 = vadd.f32 %v83, %v84
    %86 = vadd.xlane.f32.xlu0 %v85
    %v87 = vpop.xlane.xlu0 %86
    %v88 = vrot.slane %v87, 4
    %v89 = vadd.f32 %v87, %v88
    %v90 = vrot.slane %v89, 2
    %v91 = vadd.f32 %v89, %v90
    %v92 = vrot.slane %v91, 1
    %v93 = vadd.f32 %v91, %v92
    %s94 = vtos %v93
    %v95 = vstv %s94
    %v96 = vmul.f32 %v80, 0.0014204546
    %v97 = vmul.f32 %v95, 0.0014204546
    %v98 = vmul.f32 %v96, %v96
    %v99 = vsub.f32 %v97, %v98
    %v100 = vmul.f32 %v99, 1.0014225
    %v101 = vmax.f32 %v100, 0.0
    %v102 = vrsqrt.pop %v101
    %v103 = vmul.f32 %v102, %v101
    %v104 = vmul.f32 %v103, %v102
    %v105 = vmul.f32 0.5, %v104
    %v106 = vsub.f32 1.5, %v105
    %v107 = vmul.f32 %v102, %v106
    %v108 = vmul.f32 %v101, %v107
    %vm109 = vcmp.eq.f32.partialorder %v101, inf
    %v110 = vsel %vm109, %v101, %v108
    %vm111 = vcmp.eq.f32.partialorder %v101, 0.0
    %v112 = vand.u32 %v101, 2147483648
    %v113 = vsel %vm111, %v112, %v110
    %v114 = vadd.f32 %v113, 1e-05
    %v115 = vsub.f32 %v64, %v96
    %v116 = vsub.f32 %v65, %v96
    %v117 = vrcp.pop %v114
    %v118 = vmul.f32 %v114, %v117
    %v119 = vsub.f32 1.0, %v118
    %v120 = vmul.f32 %v117, %v119
    %v121 = vadd.f32 %v117, %v120
    %vm122 = vweird.f32 %v114
    %vm123 = vweird.f32 %v117
    %vm124 = vmor %vm122, %vm123
    %v125 = vsel %vm124, %v117, %v121
    %v126 = vand.u32 2147483647, %v114
    %vm127 = vcmp.eq.f32.partialorder %v126, 8.507059e+37
    %v128 = vand.u32 %v114, 2147483648
    %v129 = vor.u32 1.1754944e-38, %v128
    %v130 = vsel %vm127, %v129, %v125
    %v131 = vmul.f32 %v115, %v130
    %v132 = vmul.f32 %v116, %v130
    %s133 = scalar_lea.vmem %s0, 16
    %v134 = vld [vmem:[%s133] sm:$0xff]
    %v135 = vld [vmem:[%s133 + $0x8] sm:$0x7]
    %v136 = vmax.f32 %v134, 1e-10
    %v137 = vmax.f32 %v135, 1e-10
    %v138 = vlog2.pop %v136
    %v139 = vmul.f32 %v138, 0.6931472
    %v140 = vlog2.pop %v137
    %v141 = vmul.f32 %v140, 0.6931472
    %v142 = vmul.f32 %v139, 0.4342945
    %v143 = vmul.f32 %v141, 0.4342945
    %v144 = vmul.f32 %v142, 10.0
    %v145 = vmul.f32 %v143, 10.0
    %v146 = vsel %vm66, %v144, 0.0
    %v147 = vsel %vm68, %v145, 0.0
    %v148 = vadd.f32 %v146, %v147
    %149 = vadd.xlane.f32.xlu0 %v148
    %v150 = vpop.xlane.xlu0 %149
    %v151 = vrot.slane %v150, 4
    %v152 = vadd.f32 %v150, %v151
    %v153 = vrot.slane %v152, 2
    %v154 = vadd.f32 %v152, %v153
    %v155 = vrot.slane %v154, 1
    %v156 = vadd.f32 %v154, %v155
    %s157 = vtos %v156
    %v158 = vstv %s157
    %v159 = vmul.f32 %v144, %v144
    %v160 = vmul.f32 %v145, %v145
    %v161 = vsel %vm66, %v159, 0.0
    %v162 = vsel %vm68, %v160, 0.0
    %v163 = vadd.f32 %v161, %v162
    %164 = vadd.xlane.f32.xlu0 %v163
    %v165 = vpop.xlane.xlu0 %164
    %v166 = vrot.slane %v165, 4
    %v167 = vadd.f32 %v165, %v166
    %v168 = vrot.slane %v167, 2
    %v169 = vadd.f32 %v167, %v168
    %v170 = vrot.slane %v169, 1
    %v171 = vadd.f32 %v169, %v170
    %s172 = vtos %v171
    %v173 = vstv %s172
    %v174 = vmul.f32 %v158, 0.0014204546
    %v175 = vmul.f32 %v173, 0.0014204546
    %v176 = vmul.f32 %v174, %v174
    %v177 = vsub.f32 %v175, %v176
    %v178 = vmul.f32 %v177, 1.0014225
    %v179 = vmax.f32 %v178, 0.0
    %v180 = vrsqrt.pop %v179
    %v181 = vmul.f32 %v180, %v179
    %v182 = vmul.f32 %v181, %v180
    %v183 = vmul.f32 0.5, %v182
    %v184 = vsub.f32 1.5, %v183
    %v185 = vmul.f32 %v180, %v184
    %v186 = vmul.f32 %v179, %v185
    %vm187 = vcmp.eq.f32.partialorder %v179, inf
    %v188 = vsel %vm187, %v179, %v186
    %vm189 = vcmp.eq.f32.partialorder %v179, 0.0
    %v190 = vand.u32 %v179, 2147483648
    %v191 = vsel %vm189, %v190, %v188
    %v192 = vadd.f32 %v191, 1e-05
    %v193 = vsub.f32 %v144, %v174
    %v194 = vsub.f32 %v145, %v174
    %v195 = vrcp.pop %v192
    %v196 = vmul.f32 %v192, %v195
    %v197 = vsub.f32 1.0, %v196
    %v198 = vmul.f32 %v195, %v197
    %v199 = vadd.f32 %v195, %v198
    %vm200 = vweird.f32 %v192
    %vm201 = vweird.f32 %v195
    %vm202 = vmor %vm200, %vm201
    %v203 = vsel %vm202, %v195, %v199
    %v204 = vand.u32 2147483647, %v192
    %vm205 = vcmp.eq.f32.partialorder %v204, 8.507059e+37
    %v206 = vand.u32 %v192, 2147483648
    %v207 = vor.u32 1.1754944e-38, %v206
    %v208 = vsel %vm205, %v207, %v203
    %v209 = vmul.f32 %v193, %v208
    %v210 = vmul.f32 %v194, %v208
    %vm213 = vcmask 1042432
    %v214 = vrot.slane %v209, 5
    %v215 = vrot.slane %v210, 5
    %v216 = vsel %vm213, %v214, %v215
    %v218 = vsel %vm213, %v132, %v214
    %v219 = vld [vmem:[%s1] sm:$0xff]
    %v220 = vld [vmem:[%s1 + $0x8] sm:$0xff]
    %v221 = vld [vmem:[%s1 + $0x10] sm:$0xff]
    %v222 = vld [vmem:[%s1 + $0x18] sm:$0xff]
    %v223 = vld [vmem:[%s1 + $0x20] sm:$0xff]
    %v224 = vld [vmem:[%s1 + $0x28] sm:$0xff]
    %v225 = vld [vmem:[%s1 + $0x30] sm:$0xff]
    %v226 = vld [vmem:[%s1 + $0x38] sm:$0xff]
    %v227 = vld [vmem:[%s2] sm:$0x1]
    %v229 = vperm.slane %v227, 0
    %v232 = vsel %vm66, %v131, 0
    %v235 = vsel %vm66, %v218, 0
    %v237 = vsel %vm66, %v216, 0
    %239 = vmatpush.msra.mxu0 0.0
    %240 = vmatpush.msra.mxu0 0.0
    %241 = vmatpush.msra.mxu0 0.0
    %242 = vmatpush.msra.mxu0 0.0
    %243 = vmatpush.msra.mxu0 0.0
    %244 = vmatpush.msra.mxu0 0.0
    %245 = vmatpush.msra.mxu0 0.0
    %246 = vmatpush.msra.mxu0 0.0
    %247 = vmatpush.msra.mxu0 %v226
    %248 = vmatpush.msra.mxu0 %v225
    %249 = vmatpush.msra.mxu0 %v224
    %250 = vmatpush.msra.mxu0 %v223
    %251 = vmatpush.msra.mxu0 %v222
    %252 = vmatpush.msra.mxu0 %v221
    %253 = vmatpush.msra.mxu0 %v220
    %254 = vmatpush.msra.mxu0 %v219
    %255 = vmatmul.f32.gmra.mxu0 %v232
    %v256 = vpop.f32.mrf.mxu0
    %v257 = vadd.f32 %v229, %v256
    %258 = vmatmul.f32.gmra.mxu0 %v235
    %v259 = vpop.f32.mrf.mxu0
    %v260 = vadd.f32 %v229, %v259
    %261 = vmatmul.f32.gmra.mxu0 %v237
    %v262 = vpop.f32.mrf.mxu0
    %v263 = vadd.f32 %v229, %v262
    %264 = vdwg.mxu0
    %v265 = vmax.f32 %v257, 0.0
    %v266 = vmax.f32 %v260, 0.0
    %v267 = vmax.f32 %v263, 0.0
    %271 = vrot.lane.b32.xlu0 %v257, 96
    %v272 = vpop.permute.xlu0 %271
    %273 = vrot.lane.b32.xlu0 %v260, 96
    %v274 = vpop.permute.xlu0 %273
    %275 = vrot.lane.b32.xlu0 %v263, 96
    %v276 = vpop.permute.xlu0 %275
    %v280 = vadd.f32 %v265, %v272
    %v281 = vadd.f32 %v266, %v274
    %v282 = vadd.f32 %v267, %v276
    %v283 = vld [vmem:[%s3] sm:$0xff]
    %v284 = vld [vmem:[%s3 + $0x8] sm:$0xff]
    %v285 = vld [vmem:[%s3 + $0x10] sm:$0xff]
    %v286 = vld [vmem:[%s3 + $0x18] sm:$0xff]
    %v287 = vld [vmem:[%s4] sm:$0x1]
    %v289 = vperm.slane %v287, 0
    %vm291 = vcmask 261120
    %v293 = vsel %vm291, %v280, 0
    %v296 = vsel %vm291, %v281, 0
    %v299 = vsel %vm291, %v282, 0
    %301 = vmatpush.msra.mxu0 0.0
    %302 = vmatpush.msra.mxu0 0.0
    %303 = vmatpush.msra.mxu0 0.0
    %304 = vmatpush.msra.mxu0 0.0
    %305 = vmatpush.msra.mxu0 0.0
    %306 = vmatpush.msra.mxu0 0.0
    %307 = vmatpush.msra.mxu0 0.0
    %308 = vmatpush.msra.mxu0 0.0
    %309 = vmatpush.msra.mxu0 0.0
    %310 = vmatpush.msra.mxu0 0.0
    %311 = vmatpush.msra.mxu0 0.0
    %312 = vmatpush.msra.mxu0 0.0
    %313 = vmatpush.msra.mxu0 %v286
    %314 = vmatpush.msra.mxu0 %v285
    %315 = vmatpush.msra.mxu0 %v284
    %316 = vmatpush.msra.mxu0 %v283
    %317 = vmatmul.f32.gmra.mxu0 %v293
    %v318 = vpop.f32.mrf.mxu0
    %v319 = vadd.f32 %v289, %v318
    %320 = vmatmul.f32.gmra.mxu0 %v296
    %v321 = vpop.f32.mrf.mxu0
    %v322 = vadd.f32 %v289, %v321
    %323 = vmatmul.f32.gmra.mxu0 %v299
    %v324 = vpop.f32.mrf.mxu0
    %v325 = vadd.f32 %v289, %v324
    %326 = vdwg.mxu0
    %v327 = vld [vmem:[%s5] sm:$0xff]
    %v328 = vld [vmem:[%s5 + $0x8] sm:$0xff]
    %v329 = vld [vmem:[%s5 + $0x10] sm:$0xff]
    %v330 = vld [vmem:[%s5 + $0x18] sm:$0xff]
    %v331 = vld [vmem:[%s6] sm:$0x1]
    %v333 = vrot.slane %v322, 2
    %vm335 = vcmask 1040384
    %v336 = vsel %vm335, %v319, %v333
    %v338 = vperm.slane %v331, 0
    %v341 = vsel %vm291, 0.0, 0
    %343 = vmatpush.msra.mxu0 0.0
    %344 = vmatpush.msra.mxu0 0.0
    %345 = vmatpush.msra.mxu0 0.0
    %346 = vmatpush.msra.mxu0 0.0
    %347 = vmatpush.msra.mxu0 0.0
    %348 = vmatpush.msra.mxu0 0.0
    %349 = vmatpush.msra.mxu0 0.0
    %350 = vmatpush.msra.mxu0 0.0
    %351 = vmatpush.msra.mxu0 0.0
    %352 = vmatpush.msra.mxu0 0.0
    %353 = vmatpush.msra.mxu0 0.0
    %354 = vmatpush.msra.mxu0 0.0
    %355 = vmatpush.msra.mxu0 %v330
    %356 = vmatpush.msra.mxu0 %v329
    %357 = vmatpush.msra.mxu0 %v328
    %358 = vmatpush.msra.mxu0 %v327
    %359 = vmatmul.f32.gmra.mxu0 %v341
    %v360 = vpop.f32.mrf.mxu0
    %v361 = vadd.f32 %v338, %v360
    %362 = vdwg.mxu0
    %v363 = vadd.f32 %v336, %v361
    %v364 = vxor.u32 %v363, 2147483648
    %v365 = vmul.f32 %v364, 1.442695
    %v366 = vpow.pop %v365
    %v367 = vadd.f32 %v366, 1.0
    %v368 = vrcp.pop %v367
    %v369 = vmul.f32 %v367, %v368
    %v370 = vsub.f32 1.0, %v369
    %v371 = vmul.f32 %v368, %v370
    %v372 = vadd.f32 %v368, %v371
    %vm373 = vweird.f32 %v367
    %vm374 = vweird.f32 %v368
    %vm375 = vmor %vm373, %vm374
    %v376 = vsel %vm375, %v368, %v372
    %v377 = vand.u32 2147483647, %v367
    %vm378 = vcmp.eq.f32.partialorder %v377, 8.507059e+37
    %v379 = vand.u32 %v367, 2147483648
    %v380 = vor.u32 1.1754944e-38, %v379
    %v381 = vsel %vm378, %v380, %v376
    %v382 = vmul.f32 1.0, %v381
    %384 = vrot.lane.b32.xlu0 %v361, 64
    %v385 = vpop.permute.xlu0 %384
    %v387 = vmul.f32 %v382, %v385
    %389 = vrot.lane.b32.xlu0 %v387, 64
    %v390 = vpop.permute.xlu0 %389
    %v392 = vadd.f32 %v336, %v390
    %v393 = vtanh.pop %v392
    %v394 = vsub.f32 1.0, %v382
    %396 = vrot.lane.b32.xlu0 %v393, 96
    %v397 = vpop.permute.xlu0 %396
    %v399 = vmul.f32 %v394, %v397
    %v400 = vmul.f32 %v382, 0.0
    %v401 = vadd.f32 %v399, %v400
    %v403 = vrot.slane %v319, 1
    %v405 = vrot.slane %v322, 3
    %v407 = vsel %vm335, %v403, %v405
    %409 = vrot.lane.b32.xlu0 %v401, 96
    %v410 = vpop.permute.xlu0 %409
    %v411 = vsel %vm291, %v410, 0
    %413 = vmatpush.msra.mxu0 0.0
    %414 = vmatpush.msra.mxu0 0.0
    %415 = vmatpush.msra.mxu0 0.0
    %416 = vmatpush.msra.mxu0 0.0
    %417 = vmatpush.msra.mxu0 0.0
    %418 = vmatpush.msra.mxu0 0.0
    %419 = vmatpush.msra.mxu0 0.0
    %420 = vmatpush.msra.mxu0 0.0
    %421 = vmatpush.msra.mxu0 0.0
    %422 = vmatpush.msra.mxu0 0.0
    %423 = vmatpush.msra.mxu0 0.0
    %424 = vmatpush.msra.mxu0 0.0
    %425 = vmatpush.msra.mxu0 %v330
    %426 = vmatpush.msra.mxu0 %v329
    %427 = vmatpush.msra.mxu0 %v328
    %428 = vmatpush.msra.mxu0 %v327
    %429 = vmatmul.f32.gmra.mxu0 %v411
    %v430 = vpop.f32.mrf.mxu0
    %v431 = vadd.f32 %v338, %v430
    %432 = vdwg.mxu0
    %v433 = vadd.f32 %v407, %v431
    %v434 = vxor.u32 %v433, 2147483648
    %v435 = vmul.f32 %v434, 1.442695
    %v436 = vpow.pop %v435
    %v437 = vadd.f32 %v436, 1.0
    %v438 = vrcp.pop %v437
    %v439 = vmul.f32 %v437, %v438
    %v440 = vsub.f32 1.0, %v439
    %v441 = vmul.f32 %v438, %v440
    %v442 = vadd.f32 %v438, %v441
    %vm443 = vweird.f32 %v437
    %vm444 = vweird.f32 %v438
    %vm445 = vmor %vm443, %vm444
    %v446 = vsel %vm445, %v438, %v442
    %v447 = vand.u32 2147483647, %v437
    %vm448 = vcmp.eq.f32.partialorder %v447, 8.507059e+37
    %v449 = vand.u32 %v437, 2147483648
    %v450 = vor.u32 1.1754944e-38, %v449
    %v451 = vsel %vm448, %v450, %v446
    %v452 = vmul.f32 1.0, %v451
    %454 = vrot.lane.b32.xlu0 %v431, 64
    %v455 = vpop.permute.xlu0 %454
    %v457 = vmul.f32 %v452, %v455
    %459 = vrot.lane.b32.xlu0 %v457, 64
    %v460 = vpop.permute.xlu0 %459
    %v462 = vadd.f32 %v407, %v460
    %v463 = vtanh.pop %v462
    %v464 = vsub.f32 1.0, %v452
    %466 = vrot.lane.b32.xlu0 %v463, 96
    %v467 = vpop.permute.xlu0 %466
    %v469 = vmul.f32 %v464, %v467
    %v470 = vmul.f32 %v452, %v401
    %v471 = vadd.f32 %v469, %v470
    %v472 = vrot.slane %v319, 2
    %v474 = vrot.slane %v322, 4
    %v476 = vsel %vm335, %v472, %v474
    %478 = vrot.lane.b32.xlu0 %v471, 96
    %v479 = vpop.permute.xlu0 %478
    %v480 = vsel %vm291, %v479, 0
    %482 = vmatpush.msra.mxu0 0.0
    %483 = vmatpush.msra.mxu0 0.0
    %484 = vmatpush.msra.mxu0 0.0
    %485 = vmatpush.msra.mxu0 0.0
    %486 = vmatpush.msra.mxu0 0.0
    %487 = vmatpush.msra.mxu0 0.0
    %488 = vmatpush.msra.mxu0 0.0
    %489 = vmatpush.msra.mxu0 0.0
    %490 = vmatpush.msra.mxu0 0.0
    %491 = vmatpush.msra.mxu0 0.0
    %492 = vmatpush.msra.mxu0 0.0
    %493 = vmatpush.msra.mxu0 0.0
    %494 = vmatpush.msra.mxu0 %v330
    %495 = vmatpush.msra.mxu0 %v329
    %496 = vmatpush.msra.mxu0 %v328
    %497 = vmatpush.msra.mxu0 %v327
    %498 = vmatmul.f32.gmra.mxu0 %v480
    %v499 = vpop.f32.mrf.mxu0
    %v500 = vadd.f32 %v338, %v499
    %501 = vdwg.mxu0
    %v502 = vadd.f32 %v476, %v500
    %v503 = vxor.u32 %v502, 2147483648
    %v504 = vmul.f32 %v503, 1.442695
    %v505 = vpow.pop %v504
    %v506 = vadd.f32 %v505, 1.0
    %v507 = vrcp.pop %v506
    %v508 = vmul.f32 %v506, %v507
    %v509 = vsub.f32 1.0, %v508
    %v510 = vmul.f32 %v507, %v509
    %v511 = vadd.f32 %v507, %v510
    %vm512 = vweird.f32 %v506
    %vm513 = vweird.f32 %v507
    %vm514 = vmor %vm512, %vm513
    %v515 = vsel %vm514, %v507, %v511
    %v516 = vand.u32 2147483647, %v506
    %vm517 = vcmp.eq.f32.partialorder %v516, 8.507059e+37
    %v518 = vand.u32 %v506, 2147483648
    %v519 = vor.u32 1.1754944e-38, %v518
    %v520 = vsel %vm517, %v519, %v515
    %v521 = vmul.f32 1.0, %v520
    %523 = vrot.lane.b32.xlu0 %v500, 64
    %v524 = vpop.permute.xlu0 %523
    %v526 = vmul.f32 %v521, %v524
    %528 = vrot.lane.b32.xlu0 %v526, 64
    %v529 = vpop.permute.xlu0 %528
    %v531 = vadd.f32 %v476, %v529
    %v532 = vtanh.pop %v531
    %v533 = vsub.f32 1.0, %v521
    %535 = vrot.lane.b32.xlu0 %v532, 96
    %v536 = vpop.permute.xlu0 %535
    %v538 = vmul.f32 %v533, %v536
    %v539 = vmul.f32 %v521, %v471
    %v540 = vadd.f32 %v538, %v539
    %v541 = vrot.slane %v319, 3
    %v543 = vrot.slane %v322, 5
    %v545 = vsel %vm335, %v541, %v543
    %547 = vrot.lane.b32.xlu0 %v540, 96
    %v548 = vpop.permute.xlu0 %547
    %v549 = vsel %vm291, %v548, 0
    %551 = vmatpush.msra.mxu0 0.0
    %552 = vmatpush.msra.mxu0 0.0
    %553 = vmatpush.msra.mxu0 0.0
    %554 = vmatpush.msra.mxu0 0.0
    %555 = vmatpush.msra.mxu0 0.0
    %556 = vmatpush.msra.mxu0 0.0
    %557 = vmatpush.msra.mxu0 0.0
    %558 = vmatpush.msra.mxu0 0.0
    %559 = vmatpush.msra.mxu0 0.0
    %560 = vmatpush.msra.mxu0 0.0
    %561 = vmatpush.msra.mxu0 0.0
    %562 = vmatpush.msra.mxu0 0.0
    %563 = vmatpush.msra.mxu0 %v330
    %564 = vmatpush.msra.mxu0 %v329
    %565 = vmatpush.msra.mxu0 %v328
    %566 = vmatpush.msra.mxu0 %v327
    %567 = vmatmul.f32.gmra.mxu0 %v549
    %v568 = vpop.f32.mrf.mxu0
    %v569 = vadd.f32 %v338, %v568
    %570 = vdwg.mxu0
    %v571 = vadd.f32 %v545, %v569
    %v572 = vxor.u32 %v571, 2147483648
    %v573 = vmul.f32 %v572, 1.442695
    %v574 = vpow.pop %v573
    %v575 = vadd.f32 %v574, 1.0
    %v576 = vrcp.pop %v575
    %v577 = vmul.f32 %v575, %v576
    %v578 = vsub.f32 1.0, %v577
    %v579 = vmul.f32 %v576, %v578
    %v580 = vadd.f32 %v576, %v579
    %vm581 = vweird.f32 %v575
    %vm582 = vweird.f32 %v576
    %vm583 = vmor %vm581, %vm582
    %v584 = vsel %vm583, %v576, %v580
    %v585 = vand.u32 2147483647, %v575
    %vm586 = vcmp.eq.f32.partialorder %v585, 8.507059e+37
    %v587 = vand.u32 %v575, 2147483648
    %v588 = vor.u32 1.1754944e-38, %v587
    %v589 = vsel %vm586, %v588, %v584
    %v590 = vmul.f32 1.0, %v589
    %592 = vrot.lane.b32.xlu0 %v569, 64
    %v593 = vpop.permute.xlu0 %592
    %v595 = vmul.f32 %v590, %v593
    %597 = vrot.lane.b32.xlu0 %v595, 64
    %v598 = vpop.permute.xlu0 %597
    %v600 = vadd.f32 %v545, %v598
    %v601 = vtanh.pop %v600
    %v602 = vsub.f32 1.0, %v590
    %604 = vrot.lane.b32.xlu0 %v601, 96
    %v605 = vpop.permute.xlu0 %604
    %v607 = vmul.f32 %v602, %v605
    %v608 = vmul.f32 %v590, %v540
    %v609 = vadd.f32 %v607, %v608
    %v610 = vrot.slane %v319, 4
    %v612 = vrot.slane %v322, 6
    %v614 = vsel %vm335, %v610, %v612
    %616 = vrot.lane.b32.xlu0 %v609, 96
    %v617 = vpop.permute.xlu0 %616
    %v618 = vsel %vm291, %v617, 0
    %620 = vmatpush.msra.mxu0 0.0
    %621 = vmatpush.msra.mxu0 0.0
    %622 = vmatpush.msra.mxu0 0.0
    %623 = vmatpush.msra.mxu0 0.0
    %624 = vmatpush.msra.mxu0 0.0
    %625 = vmatpush.msra.mxu0 0.0
    %626 = vmatpush.msra.mxu0 0.0
    %627 = vmatpush.msra.mxu0 0.0
    %628 = vmatpush.msra.mxu0 0.0
    %629 = vmatpush.msra.mxu0 0.0
    %630 = vmatpush.msra.mxu0 0.0
    %631 = vmatpush.msra.mxu0 0.0
    %632 = vmatpush.msra.mxu0 %v330
    %633 = vmatpush.msra.mxu0 %v329
    %634 = vmatpush.msra.mxu0 %v328
    %635 = vmatpush.msra.mxu0 %v327
    %636 = vmatmul.f32.gmra.mxu0 %v618
    %v637 = vpop.f32.mrf.mxu0
    %v638 = vadd.f32 %v338, %v637
    %639 = vdwg.mxu0
    %v640 = vadd.f32 %v614, %v638
    %v641 = vxor.u32 %v640, 2147483648
    %v642 = vmul.f32 %v641, 1.442695
    %v643 = vpow.pop %v642
    %v644 = vadd.f32 %v643, 1.0
    %v645 = vrcp.pop %v644
    %v646 = vmul.f32 %v644, %v645
    %v647 = vsub.f32 1.0, %v646
    %v648 = vmul.f32 %v645, %v647
    %v649 = vadd.f32 %v645, %v648
    %vm650 = vweird.f32 %v644
    %vm651 = vweird.f32 %v645
    %vm652 = vmor %vm650, %vm651
    %v653 = vsel %vm652, %v645, %v649
    %v654 = vand.u32 2147483647, %v644
    %vm655 = vcmp.eq.f32.partialorder %v654, 8.507059e+37
    %v656 = vand.u32 %v644, 2147483648
    %v657 = vor.u32 1.1754944e-38, %v656
    %v658 = vsel %vm655, %v657, %v653
    %v659 = vmul.f32 1.0, %v658
    %661 = vrot.lane.b32.xlu0 %v638, 64
    %v662 = vpop.permute.xlu0 %661
    %v664 = vmul.f32 %v659, %v662
    %666 = vrot.lane.b32.xlu0 %v664, 64
    %v667 = vpop.permute.xlu0 %666
    %v669 = vadd.f32 %v614, %v667
    %v670 = vtanh.pop %v669
    %v671 = vsub.f32 1.0, %v659
    %673 = vrot.lane.b32.xlu0 %v670, 96
    %v674 = vpop.permute.xlu0 %673
    %v676 = vmul.f32 %v671, %v674
    %v677 = vmul.f32 %v659, %v609
    %v678 = vadd.f32 %v676, %v677
    %v679 = vrot.slane %v319, 5
    %v682 = vrot.slane %v325, 7
    %v684 = vsel %vm335, %v679, %v682
    %686 = vrot.lane.b32.xlu0 %v678, 96
    %v687 = vpop.permute.xlu0 %686
    %v688 = vsel %vm291, %v687, 0
    %690 = vmatpush.msra.mxu0 0.0
    %691 = vmatpush.msra.mxu0 0.0
    %692 = vmatpush.msra.mxu0 0.0
    %693 = vmatpush.msra.mxu0 0.0
    %694 = vmatpush.msra.mxu0 0.0
    %695 = vmatpush.msra.mxu0 0.0
    %696 = vmatpush.msra.mxu0 0.0
    %697 = vmatpush.msra.mxu0 0.0
    %698 = vmatpush.msra.mxu0 0.0
    %699 = vmatpush.msra.mxu0 0.0
    %700 = vmatpush.msra.mxu0 0.0
    %701 = vmatpush.msra.mxu0 0.0
    %702 = vmatpush.msra.mxu0 %v330
    %703 = vmatpush.msra.mxu0 %v329
    %704 = vmatpush.msra.mxu0 %v328
    %705 = vmatpush.msra.mxu0 %v327
    %706 = vmatmul.f32.gmra.mxu0 %v688
    %v707 = vpop.f32.mrf.mxu0
    %v708 = vadd.f32 %v338, %v707
    %709 = vdwg.mxu0
    %v710 = vadd.f32 %v684, %v708
    %v711 = vxor.u32 %v710, 2147483648
    %v712 = vmul.f32 %v711, 1.442695
    %v713 = vpow.pop %v712
    %v714 = vadd.f32 %v713, 1.0
    %v715 = vrcp.pop %v714
    %v716 = vmul.f32 %v714, %v715
    %v717 = vsub.f32 1.0, %v716
    %v718 = vmul.f32 %v715, %v717
    %v719 = vadd.f32 %v715, %v718
    %vm720 = vweird.f32 %v714
    %vm721 = vweird.f32 %v715
    %vm722 = vmor %vm720, %vm721
    %v723 = vsel %vm722, %v715, %v719
    %v724 = vand.u32 2147483647, %v714
    %vm725 = vcmp.eq.f32.partialorder %v724, 8.507059e+37
    %v726 = vand.u32 %v714, 2147483648
    %v727 = vor.u32 1.1754944e-38, %v726
    %v728 = vsel %vm725, %v727, %v723
    %v729 = vmul.f32 1.0, %v728
    %731 = vrot.lane.b32.xlu0 %v708, 64
    %v732 = vpop.permute.xlu0 %731
    %v734 = vmul.f32 %v729, %v732
    %736 = vrot.lane.b32.xlu0 %v734, 64
    %v737 = vpop.permute.xlu0 %736
    %v739 = vadd.f32 %v684, %v737
    %v740 = vtanh.pop %v739
    %v741 = vsub.f32 1.0, %v729
    %743 = vrot.lane.b32.xlu0 %v740, 96
    %v744 = vpop.permute.xlu0 %743
    %v746 = vmul.f32 %v741, %v744
    %v747 = vmul.f32 %v729, %v678
    %v748 = vadd.f32 %v746, %v747
    %v749 = vrot.slane %v319, 6
    %v751 = vsel %vm335, %v749, %v325
    %753 = vrot.lane.b32.xlu0 %v748, 96
    %v754 = vpop.permute.xlu0 %753
    %v755 = vsel %vm291, %v754, 0
    %757 = vmatpush.msra.mxu0 0.0
    %758 = vmatpush.msra.mxu0 0.0
    %759 = vmatpush.msra.mxu0 0.0
    %760 = vmatpush.msra.mxu0 0.0
    %761 = vmatpush.msra.mxu0 0.0
    %762 = vmatpush.msra.mxu0 0.0
    %763 = vmatpush.msra.mxu0 0.0
    %764 = vmatpush.msra.mxu0 0.0
    %765 = vmatpush.msra.mxu0 0.0
    %766 = vmatpush.msra.mxu0 0.0
    %767 = vmatpush.msra.mxu0 0.0
    %768 = vmatpush.msra.mxu0 0.0
    %769 = vmatpush.msra.mxu0 %v330
    %770 = vmatpush.msra.mxu0 %v329
    %771 = vmatpush.msra.mxu0 %v328
    %772 = vmatpush.msra.mxu0 %v327
    %773 = vmatmul.f32.gmra.mxu0 %v755
    %v774 = vpop.f32.mrf.mxu0
    %v775 = vadd.f32 %v338, %v774
    %776 = vdwg.mxu0
    %v777 = vadd.f32 %v751, %v775
    %v778 = vxor.u32 %v777, 2147483648
    %v779 = vmul.f32 %v778, 1.442695
    %v780 = vpow.pop %v779
    %v781 = vadd.f32 %v780, 1.0
    %v782 = vrcp.pop %v781
    %v783 = vmul.f32 %v781, %v782
    %v784 = vsub.f32 1.0, %v783
    %v785 = vmul.f32 %v782, %v784
    %v786 = vadd.f32 %v782, %v785
    %vm787 = vweird.f32 %v781
    %vm788 = vweird.f32 %v782
    %vm789 = vmor %vm787, %vm788
    %v790 = vsel %vm789, %v782, %v786
    %v791 = vand.u32 2147483647, %v781
    %vm792 = vcmp.eq.f32.partialorder %v791, 8.507059e+37
    %v793 = vand.u32 %v781, 2147483648
    %v794 = vor.u32 1.1754944e-38, %v793
    %v795 = vsel %vm792, %v794, %v790
    %v796 = vmul.f32 1.0, %v795
    %798 = vrot.lane.b32.xlu0 %v775, 64
    %v799 = vpop.permute.xlu0 %798
    %v801 = vmul.f32 %v796, %v799
    %803 = vrot.lane.b32.xlu0 %v801, 64
    %v804 = vpop.permute.xlu0 %803
    %v806 = vadd.f32 %v751, %v804
    %v807 = vtanh.pop %v806
    %v808 = vsub.f32 1.0, %v796
    %810 = vrot.lane.b32.xlu0 %v807, 96
    %v811 = vpop.permute.xlu0 %810
    %v813 = vmul.f32 %v808, %v811
    %v814 = vmul.f32 %v796, %v748
    %v815 = vadd.f32 %v813, %v814
    %v816 = vrot.slane %v319, 7
    %v818 = vrot.slane %v325, 1
    %v820 = vsel %vm335, %v816, %v818
    %822 = vrot.lane.b32.xlu0 %v815, 96
    %v823 = vpop.permute.xlu0 %822
    %v824 = vsel %vm291, %v823, 0
    %826 = vmatpush.msra.mxu0 0.0
    %827 = vmatpush.msra.mxu0 0.0
    %828 = vmatpush.msra.mxu0 0.0
    %829 = vmatpush.msra.mxu0 0.0
    %830 = vmatpush.msra.mxu0 0.0
    %831 = vmatpush.msra.mxu0 0.0
    %832 = vmatpush.msra.mxu0 0.0
    %833 = vmatpush.msra.mxu0 0.0
    %834 = vmatpush.msra.mxu0 0.0
    %835 = vmatpush.msra.mxu0 0.0
    %836 = vmatpush.msra.mxu0 0.0
    %837 = vmatpush.msra.mxu0 0.0
    %838 = vmatpush.msra.mxu0 %v330
    %839 = vmatpush.msra.mxu0 %v329
    %840 = vmatpush.msra.mxu0 %v328
    %841 = vmatpush.msra.mxu0 %v327
    %842 = vmatmul.f32.gmra.mxu0 %v824
    %v843 = vpop.f32.mrf.mxu0
    %v844 = vadd.f32 %v338, %v843
    %845 = vdwg.mxu0
    %v846 = vadd.f32 %v820, %v844
    %v847 = vxor.u32 %v846, 2147483648
    %v848 = vmul.f32 %v847, 1.442695
    %v849 = vpow.pop %v848
    %v850 = vadd.f32 %v849, 1.0
    %v851 = vrcp.pop %v850
    %v852 = vmul.f32 %v850, %v851
    %v853 = vsub.f32 1.0, %v852
    %v854 = vmul.f32 %v851, %v853
    %v855 = vadd.f32 %v851, %v854
    %vm856 = vweird.f32 %v850
    %vm857 = vweird.f32 %v851
    %vm858 = vmor %vm856, %vm857
    %v859 = vsel %vm858, %v851, %v855
    %v860 = vand.u32 2147483647, %v850
    %vm861 = vcmp.eq.f32.partialorder %v860, 8.507059e+37
    %v862 = vand.u32 %v850, 2147483648
    %v863 = vor.u32 1.1754944e-38, %v862
    %v864 = vsel %vm861, %v863, %v859
    %v865 = vmul.f32 1.0, %v864
    %867 = vrot.lane.b32.xlu0 %v844, 64
    %v868 = vpop.permute.xlu0 %867
    %v870 = vmul.f32 %v865, %v868
    %872 = vrot.lane.b32.xlu0 %v870, 64
    %v873 = vpop.permute.xlu0 %872
    %v875 = vadd.f32 %v820, %v873
    %v876 = vtanh.pop %v875
    %v877 = vsub.f32 1.0, %v865
    %879 = vrot.lane.b32.xlu0 %v876, 96
    %v880 = vpop.permute.xlu0 %879
    %v882 = vmul.f32 %v877, %v880
    %v883 = vmul.f32 %v865, %v815
    %v884 = vadd.f32 %v882, %v883
    %v885 = vrot.slane %v325, 2
    %v887 = vsel %vm335, %v322, %v885
    %889 = vrot.lane.b32.xlu0 %v884, 96
    %v890 = vpop.permute.xlu0 %889
    %v891 = vsel %vm291, %v890, 0
    %893 = vmatpush.msra.mxu0 0.0
    %894 = vmatpush.msra.mxu0 0.0
    %895 = vmatpush.msra.mxu0 0.0
    %896 = vmatpush.msra.mxu0 0.0
    %897 = vmatpush.msra.mxu0 0.0
    %898 = vmatpush.msra.mxu0 0.0
    %899 = vmatpush.msra.mxu0 0.0
    %900 = vmatpush.msra.mxu0 0.0
    %901 = vmatpush.msra.mxu0 0.0
    %902 = vmatpush.msra.mxu0 0.0
    %903 = vmatpush.msra.mxu0 0.0
    %904 = vmatpush.msra.mxu0 0.0
    %905 = vmatpush.msra.mxu0 %v330
    %906 = vmatpush.msra.mxu0 %v329
    %907 = vmatpush.msra.mxu0 %v328
    %908 = vmatpush.msra.mxu0 %v327
    %909 = vmatmul.f32.gmra.mxu0 %v891
    %v910 = vpop.f32.mrf.mxu0
    %v911 = vadd.f32 %v338, %v910
    %912 = vdwg.mxu0
    %v913 = vadd.f32 %v887, %v911
    %v914 = vxor.u32 %v913, 2147483648
    %v915 = vmul.f32 %v914, 1.442695
    %v916 = vpow.pop %v915
    %v917 = vadd.f32 %v916, 1.0
    %v918 = vrcp.pop %v917
    %v919 = vmul.f32 %v917, %v918
    %v920 = vsub.f32 1.0, %v919
    %v921 = vmul.f32 %v918, %v920
    %v922 = vadd.f32 %v918, %v921
    %vm923 = vweird.f32 %v917
    %vm924 = vweird.f32 %v918
    %vm925 = vmor %vm923, %vm924
    %v926 = vsel %vm925, %v918, %v922
    %v927 = vand.u32 2147483647, %v917
    %vm928 = vcmp.eq.f32.partialorder %v927, 8.507059e+37
    %v929 = vand.u32 %v917, 2147483648
    %v930 = vor.u32 1.1754944e-38, %v929
    %v931 = vsel %vm928, %v930, %v926
    %v932 = vmul.f32 1.0, %v931
    %934 = vrot.lane.b32.xlu0 %v911, 64
    %v935 = vpop.permute.xlu0 %934
    %v937 = vmul.f32 %v932, %v935
    %939 = vrot.lane.b32.xlu0 %v937, 64
    %v940 = vpop.permute.xlu0 %939
    %v942 = vadd.f32 %v887, %v940
    %v943 = vtanh.pop %v942
    %v944 = vsub.f32 1.0, %v932
    %946 = vrot.lane.b32.xlu0 %v943, 96
    %v947 = vpop.permute.xlu0 %946
    %v949 = vmul.f32 %v944, %v947
    %v950 = vmul.f32 %v932, %v884
    %v951 = vadd.f32 %v949, %v950
    %v952 = vrot.slane %v322, 1
    %v954 = vrot.slane %v325, 3
    %v956 = vsel %vm335, %v952, %v954
    %958 = vrot.lane.b32.xlu0 %v951, 96
    %v959 = vpop.permute.xlu0 %958
    %v960 = vsel %vm291, %v959, 0
    %962 = vmatpush.msra.mxu0 0.0
    %963 = vmatpush.msra.mxu0 0.0
    %964 = vmatpush.msra.mxu0 0.0
    %965 = vmatpush.msra.mxu0 0.0
    %966 = vmatpush.msra.mxu0 0.0
    %967 = vmatpush.msra.mxu0 0.0
    %968 = vmatpush.msra.mxu0 0.0
    %969 = vmatpush.msra.mxu0 0.0
    %970 = vmatpush.msra.mxu0 0.0
    %971 = vmatpush.msra.mxu0 0.0
    %972 = vmatpush.msra.mxu0 0.0
    %973 = vmatpush.msra.mxu0 0.0
    %974 = vmatpush.msra.mxu0 %v330
    %975 = vmatpush.msra.mxu0 %v329
    %976 = vmatpush.msra.mxu0 %v328
    %977 = vmatpush.msra.mxu0 %v327
    %978 = vmatmul.f32.gmra.mxu0 %v960
    %v979 = vpop.f32.mrf.mxu0
    %v980 = vadd.f32 %v338, %v979
    %981 = vdwg.mxu0
    %v982 = vadd.f32 %v956, %v980
    %v983 = vxor.u32 %v982, 2147483648
    %v984 = vmul.f32 %v983, 1.442695
    %v985 = vpow.pop %v984
    %v986 = vadd.f32 %v985, 1.0
    %v987 = vrcp.pop %v986
    %v988 = vmul.f32 %v986, %v987
    %v989 = vsub.f32 1.0, %v988
    %v990 = vmul.f32 %v987, %v989
    %v991 = vadd.f32 %v987, %v990
    %vm992 = vweird.f32 %v986
    %vm993 = vweird.f32 %v987
    %vm994 = vmor %vm992, %vm993
    %v995 = vsel %vm994, %v987, %v991
    %v996 = vand.u32 2147483647, %v986
    %vm997 = vcmp.eq.f32.partialorder %v996, 8.507059e+37
    %v998 = vand.u32 %v986, 2147483648
    %v999 = vor.u32 1.1754944e-38, %v998
    %v1000 = vsel %vm997, %v999, %v995
    %v1001 = vmul.f32 1.0, %v1000
    %1003 = vrot.lane.b32.xlu0 %v980, 64
    %v1004 = vpop.permute.xlu0 %1003
    %v1006 = vmul.f32 %v1001, %v1004
    %1008 = vrot.lane.b32.xlu0 %v1006, 64
    %v1009 = vpop.permute.xlu0 %1008
    %v1011 = vadd.f32 %v956, %v1009
    %v1012 = vtanh.pop %v1011
    %v1013 = vsub.f32 1.0, %v1001
    %1015 = vrot.lane.b32.xlu0 %v1012, 96
    %v1016 = vpop.permute.xlu0 %1015
    %v1018 = vmul.f32 %v1013, %v1016
    %v1019 = vmul.f32 %v1001, %v951
    %v1020 = vadd.f32 %v1018, %v1019
    %v1021 = vrot.slane %v325, 4
    %v1023 = vsel %vm335, %v333, %v1021
    %1025 = vrot.lane.b32.xlu0 %v1020, 96
    %v1026 = vpop.permute.xlu0 %1025
    %v1027 = vsel %vm291, %v1026, 0
    %1029 = vmatpush.msra.mxu0 0.0
    %1030 = vmatpush.msra.mxu0 0.0
    %1031 = vmatpush.msra.mxu0 0.0
    %1032 = vmatpush.msra.mxu0 0.0
    %1033 = vmatpush.msra.mxu0 0.0
    %1034 = vmatpush.msra.mxu0 0.0
    %1035 = vmatpush.msra.mxu0 0.0
    %1036 = vmatpush.msra.mxu0 0.0
    %1037 = vmatpush.msra.mxu0 0.0
    %1038 = vmatpush.msra.mxu0 0.0
    %1039 = vmatpush.msra.mxu0 0.0
    %1040 = vmatpush.msra.mxu0 0.0
    %1041 = vmatpush.msra.mxu0 %v330
    %1042 = vmatpush.msra.mxu0 %v329
    %1043 = vmatpush.msra.mxu0 %v328
    %1044 = vmatpush.msra.mxu0 %v327
    %1045 = vmatmul.f32.gmra.mxu0 %v1027
    %v1046 = vpop.f32.mrf.mxu0
    %v1047 = vadd.f32 %v338, %v1046
    %1048 = vdwg.mxu0
    %v1049 = vadd.f32 %v1023, %v1047
    %v1050 = vxor.u32 %v1049, 2147483648
    %v1051 = vmul.f32 %v1050, 1.442695
    %v1052 = vpow.pop %v1051
    %v1053 = vadd.f32 %v1052, 1.0
    %v1054 = vrcp.pop %v1053
    %v1055 = vmul.f32 %v1053, %v1054
    %v1056 = vsub.f32 1.0, %v1055
    %v1057 = vmul.f32 %v1054, %v1056
    %v1058 = vadd.f32 %v1054, %v1057
    %vm1059 = vweird.f32 %v1053
    %vm1060 = vweird.f32 %v1054
    %vm1061 = vmor %vm1059, %vm1060
    %v1062 = vsel %vm1061, %v1054, %v1058
    %v1063 = vand.u32 2147483647, %v1053
    %vm1064 = vcmp.eq.f32.partialorder %v1063, 8.507059e+37
    %v1065 = vand.u32 %v1053, 2147483648
    %v1066 = vor.u32 1.1754944e-38, %v1065
    %v1067 = vsel %vm1064, %v1066, %v1062
    %v1068 = vmul.f32 1.0, %v1067
    %1070 = vrot.lane.b32.xlu0 %v1047, 64
    %v1071 = vpop.permute.xlu0 %1070
    %v1073 = vmul.f32 %v1068, %v1071
    %1075 = vrot.lane.b32.xlu0 %v1073, 64
    %v1076 = vpop.permute.xlu0 %1075
    %v1078 = vadd.f32 %v1023, %v1076
    %v1079 = vtanh.pop %v1078
    %v1080 = vsub.f32 1.0, %v1068
    %1082 = vrot.lane.b32.xlu0 %v1079, 96
    %v1083 = vpop.permute.xlu0 %1082
    %v1085 = vmul.f32 %v1080, %v1083
    %v1086 = vmul.f32 %v1068, %v1020
    %v1087 = vadd.f32 %v1085, %v1086
    %v1088 = vrot.slane %v471, 7
    %v1090 = vrot.slane %v540, 6
    %v1092 = vrot.slane %v609, 5
    %v1094 = vrot.slane %v678, 4
    %v1096 = vrot.slane %v748, 3
    %v1098 = vrot.slane %v815, 2
    %v1100 = vrot.slane %v884, 1
    %v1102 = vrot.slane %v1020, 7
    %v1105 = vrot.slane %v1087, 6
    %v1107 = vsel %vm335, %v401, %v1088
    %vm1108 = vcmask 1041408
    %v1109 = vsel %vm1108, %v1107, %v1090
    %v1110 = vsel %vm213, %v1109, %v1092
    %vm1111 = vcmask 1043456
    %v1112 = vsel %vm1111, %v1110, %v1094
    %vm1113 = vcmask 1044480
    %v1114 = vsel %vm1113, %v1112, %v1096
    %vm1115 = vcmask 1045504
    %v1116 = vsel %vm1115, %v1114, %v1098
    %vm1117 = vcmask 1046528
    %v1118 = vsel %vm1117, %v1116, %v1100
    %v1119 = vsel %vm335, %v951, %v1102
    %v1120 = vsel %vm1108, %v1119, %v1105
    %v1121 = vrot.slane %v401, 1
    %v1123 = vrot.slane %v540, 7
    %v1125 = vrot.slane %v609, 6
    %v1127 = vrot.slane %v678, 5
    %v1129 = vrot.slane %v748, 4
    %v1131 = vrot.slane %v815, 3
    %v1133 = vrot.slane %v884, 2
    %v1135 = vrot.slane %v951, 1
    %v1137 = vrot.slane %v1087, 7
    %v1139 = vsel %vm335, %v1121, %v471
    %v1140 = vsel %vm1108, %v1139, %v1123
    %v1141 = vsel %vm213, %v1140, %v1125
    %v1142 = vsel %vm1111, %v1141, %v1127
    %v1143 = vsel %vm1113, %v1142, %v1129
    %v1144 = vsel %vm1115, %v1143, %v1131
    %v1145 = vsel %vm1117, %v1144, %v1133
    %v1146 = vsel %vm335, %v1135, %v1020
    %v1147 = vsel %vm1108, %v1146, %v1137
    %v1150 = vrot.slane %v1145, 5
    %v1151 = vrot.slane %v1147, 5
    %v1152 = vsel %vm213, %v1150, %v1151
    %v1154 = vsel %vm213, %v1120, %v1150
    %v1155 = vld [vmem:[%s7] sm:$0xff]
    %v1156 = vld [vmem:[%s7 + $0x8] sm:$0xff]
    %v1157 = vld [vmem:[%s7 + $0x10] sm:$0xff]
    %v1158 = vld [vmem:[%s7 + $0x18] sm:$0xff]
    %v1159 = vld [vmem:[%s8] sm:$0x1]
    %v1161 = vperm.slane %v1159, 0
    %1165 = vrot.lane.b32.xlu0 %v1118, 96
    %v1166 = vpop.permute.xlu0 %1165
    %1167 = vrot.lane.b32.xlu0 %v1154, 96
    %v1168 = vpop.permute.xlu0 %1167
    %1169 = vrot.lane.b32.xlu0 %v1152, 96
    %v1170 = vpop.permute.xlu0 %1169
    %v1171 = vsel %vm291, %v1166, 0
    %v1173 = vsel %vm291, %v1168, 0
    %v1175 = vsel %vm291, %v1170, 0
    %1177 = vmatpush.msra.mxu0 0.0
    %1178 = vmatpush.msra.mxu0 0.0
    %1179 = vmatpush.msra.mxu0 0.0
    %1180 = vmatpush.msra.mxu0 0.0
    %1181 = vmatpush.msra.mxu0 0.0
    %1182 = vmatpush.msra.mxu0 0.0
    %1183 = vmatpush.msra.mxu0 0.0
    %1184 = vmatpush.msra.mxu0 0.0
    %1185 = vmatpush.msra.mxu0 0.0
    %1186 = vmatpush.msra.mxu0 0.0
    %1187 = vmatpush.msra.mxu0 0.0
    %1188 = vmatpush.msra.mxu0 0.0
    %1189 = vmatpush.msra.mxu0 %v1158
    %1190 = vmatpush.msra.mxu0 %v1157
    %1191 = vmatpush.msra.mxu0 %v1156
    %1192 = vmatpush.msra.mxu0 %v1155
    %1193 = vmatmul.f32.gmra.mxu0 %v1171
    %v1194 = vpop.f32.mrf.mxu0
    %v1195 = vadd.f32 %v1161, %v1194
    %1196 = vmatmul.f32.gmra.mxu0 %v1173
    %v1197 = vpop.f32.mrf.mxu0
    %v1198 = vadd.f32 %v1161, %v1197
    %1199 = vmatmul.f32.gmra.mxu0 %v1175
    %v1200 = vpop.f32.mrf.mxu0
    %v1201 = vadd.f32 %v1161, %v1200
    %1202 = vdwg.mxu0
    %v1203 = vld [vmem:[%s9] sm:$0xff]
    %v1204 = vld [vmem:[%s9 + $0x8] sm:$0xff]
    %v1205 = vld [vmem:[%s9 + $0x10] sm:$0xff]
    %v1206 = vld [vmem:[%s9 + $0x18] sm:$0xff]
    %v1207 = vld [vmem:[%s10] sm:$0x1]
    %v1209 = vperm.slane %v1207, 0
    %v1212 = vsel %vm291, %v1195, 0
    %v1215 = vsel %vm291, %v1198, 0
    %v1218 = vsel %vm291, %v1201, 0
    %1220 = vmatpush.msra.mxu0 0.0
    %1221 = vmatpush.msra.mxu0 0.0
    %1222 = vmatpush.msra.mxu0 0.0
    %1223 = vmatpush.msra.mxu0 0.0
    %1224 = vmatpush.msra.mxu0 0.0
    %1225 = vmatpush.msra.mxu0 0.0
    %1226 = vmatpush.msra.mxu0 0.0
    %1227 = vmatpush.msra.mxu0 0.0
    %1228 = vmatpush.msra.mxu0 0.0
    %1229 = vmatpush.msra.mxu0 0.0
    %1230 = vmatpush.msra.mxu0 0.0
    %1231 = vmatpush.msra.mxu0 0.0
    %1232 = vmatpush.msra.mxu0 %v1206
    %1233 = vmatpush.msra.mxu0 %v1205
    %1234 = vmatpush.msra.mxu0 %v1204
    %1235 = vmatpush.msra.mxu0 %v1203
    %1236 = vmatmul.f32.gmra.mxu0 %v1212
    %v1237 = vpop.f32.mrf.mxu0
    %v1238 = vadd.f32 %v1209, %v1237
    %1239 = vmatmul.f32.gmra.mxu0 %v1215
    %v1240 = vpop.f32.mrf.mxu0
    %v1241 = vadd.f32 %v1209, %v1240
    %1242 = vmatmul.f32.gmra.mxu0 %v1218
    %v1243 = vpop.f32.mrf.mxu0
    %v1244 = vadd.f32 %v1209, %v1243
    %1245 = vdwg.mxu0
    %v1246 = vxor.u32 %v1238, 2147483648
    %v1247 = vxor.u32 %v1241, 2147483648
    %v1248 = vxor.u32 %v1244, 2147483648
    %v1249 = vmul.f32 %v1246, 1.442695
    %v1250 = vpow.pop %v1249
    %v1251 = vmul.f32 %v1247, 1.442695
    %v1252 = vpow.pop %v1251
    %v1253 = vmul.f32 %v1248, 1.442695
    %v1254 = vpow.pop %v1253
    %v1255 = vadd.f32 %v1250, 1.0
    %v1256 = vadd.f32 %v1252, 1.0
    %v1257 = vadd.f32 %v1254, 1.0
    %v1258 = vrcp.pop %v1255
    %v1259 = vmul.f32 %v1255, %v1258
    %v1260 = vsub.f32 1.0, %v1259
    %v1261 = vmul.f32 %v1258, %v1260
    %v1262 = vadd.f32 %v1258, %v1261
    %vm1263 = vweird.f32 %v1255
    %vm1264 = vweird.f32 %v1258
    %vm1265 = vmor %vm1263, %vm1264
    %v1266 = vsel %vm1265, %v1258, %v1262
    %v1267 = vand.u32 2147483647, %v1255
    %vm1268 = vcmp.eq.f32.partialorder %v1267, 8.507059e+37
    %v1269 = vand.u32 %v1255, 2147483648
    %v1270 = vor.u32 1.1754944e-38, %v1269
    %v1271 = vsel %vm1268, %v1270, %v1266
    %v1272 = vmul.f32 1.0, %v1271
    %v1273 = vrcp.pop %v1256
    %v1274 = vmul.f32 %v1256, %v1273
    %v1275 = vsub.f32 1.0, %v1274
    %v1276 = vmul.f32 %v1273, %v1275
    %v1277 = vadd.f32 %v1273, %v1276
    %vm1278 = vweird.f32 %v1256
    %vm1279 = vweird.f32 %v1273
    %vm1280 = vmor %vm1278, %vm1279
    %v1281 = vsel %vm1280, %v1273, %v1277
    %v1282 = vand.u32 2147483647, %v1256
    %vm1283 = vcmp.eq.f32.partialorder %v1282, 8.507059e+37
    %v1284 = vand.u32 %v1256, 2147483648
    %v1285 = vor.u32 1.1754944e-38, %v1284
    %v1286 = vsel %vm1283, %v1285, %v1281
    %v1287 = vmul.f32 1.0, %v1286
    %v1288 = vrcp.pop %v1257
    %v1289 = vmul.f32 %v1257, %v1288
    %v1290 = vsub.f32 1.0, %v1289
    %v1291 = vmul.f32 %v1288, %v1290
    %v1292 = vadd.f32 %v1288, %v1291
    %vm1293 = vweird.f32 %v1257
    %vm1294 = vweird.f32 %v1288
    %vm1295 = vmor %vm1293, %vm1294
    %v1296 = vsel %vm1295, %v1288, %v1292
    %v1297 = vand.u32 2147483647, %v1257
    %vm1298 = vcmp.eq.f32.partialorder %v1297, 8.507059e+37
    %v1299 = vand.u32 %v1257, 2147483648
    %v1300 = vor.u32 1.1754944e-38, %v1299
    %v1301 = vsel %vm1298, %v1300, %v1296
    %v1302 = vmul.f32 1.0, %v1301
    %v1303 = vmul.f32 %v1195, %v1272
    %v1304 = vmul.f32 %v1198, %v1287
    %v1305 = vmul.f32 %v1201, %v1302
    %v1306 = vadd.f32 %v1195, %v1303
    %v1307 = vadd.f32 %v1198, %v1304
    %v1308 = vadd.f32 %v1201, %v1305
    %v1309 = vld [vmem:[%s11] sm:$0xff]
    %v1310 = vld [vmem:[%s11 + $0x8] sm:$0xff]
    %v1311 = vld [vmem:[%s11 + $0x10] sm:$0xff]
    %v1312 = vld [vmem:[%s11 + $0x18] sm:$0xff]
    %v1313 = vld [vmem:[%s12] sm:$0x1]
    %v1315 = vperm.slane %v1313, 0
    %v1318 = vsel %vm291, %v1306, 0
    %v1321 = vsel %vm291, %v1307, 0
    %v1324 = vsel %vm291, %v1308, 0
    %1326 = vmatpush.msra.mxu0 0.0
    %1327 = vmatpush.msra.mxu0 0.0
    %1328 = vmatpush.msra.mxu0 0.0
    %1329 = vmatpush.msra.mxu0 0.0
    %1330 = vmatpush.msra.mxu0 0.0
    %1331 = vmatpush.msra.mxu0 0.0
    %1332 = vmatpush.msra.mxu0 0.0
    %1333 = vmatpush.msra.mxu0 0.0
    %1334 = vmatpush.msra.mxu0 0.0
    %1335 = vmatpush.msra.mxu0 0.0
    %1336 = vmatpush.msra.mxu0 0.0
    %1337 = vmatpush.msra.mxu0 0.0
    %1338 = vmatpush.msra.mxu0 %v1312
    %1339 = vmatpush.msra.mxu0 %v1311
    %1340 = vmatpush.msra.mxu0 %v1310
    %1341 = vmatpush.msra.mxu0 %v1309
    %1342 = vmatmul.f32.gmra.mxu0 %v1318
    %v1343 = vpop.f32.mrf.mxu0
    %v1344 = vadd.f32 %v1315, %v1343
    %1345 = vmatmul.f32.gmra.mxu0 %v1321
    %v1346 = vpop.f32.mrf.mxu0
    %v1347 = vadd.f32 %v1315, %v1346
    %1348 = vmatmul.f32.gmra.mxu0 %v1324
    %v1349 = vpop.f32.mrf.mxu0
    %v1350 = vadd.f32 %v1315, %v1349
    %1351 = vdwg.mxu0
    %v1352 = vtanh.pop %v1344
    %v1353 = vtanh.pop %v1347
    %v1354 = vtanh.pop %v1350
    %v1355 = vld [vmem:[%s13] sm:$0x1]
    %v1357 = vperm.slane %v1355, 0
    %v1359 = vmul.f32 %v1352, %v1357
    %v1360 = vmul.f32 %v1353, %v1357
    %v1361 = vmul.f32 %v1354, %v1357
    %v1362 = vsel %vm291, %v1359, 0.0
    %1363 = vadd.xlane.f32.xlu0 %v1362
    %v1364 = vpop.xlane.xlu0 %1363
    %v1365 = vsel %vm291, %v1360, 0.0
    %1366 = vadd.xlane.f32.xlu0 %v1365
    %v1367 = vpop.xlane.xlu0 %1366
    %vm1368 = vcmask 259072
    %v1369 = vsel %vm1368, %v1361, 0.0
    %1370 = vadd.xlane.f32.xlu0 %v1369
    %v1371 = vpop.xlane.xlu0 %1370
    %v1372 = vsel %vm213, %v1367, -inf
    %v1373 = vmax.f32 %v1364, %v1372
    %v1374 = vrot.slane %v1373, 4
    %v1375 = vmax.f32 %v1373, %v1374
    %v1376 = vrot.slane %v1375, 2
    %v1377 = vmax.f32 %v1375, %v1376
    %v1378 = vrot.slane %v1377, 1
    %v1379 = vmax.f32 %v1377, %v1378
    %v1380 = vsub.f32 %v1364, %v1379
    %v1381 = vsub.f32 %v1367, %v1379
    %v1382 = vmul.f32 %v1380, 1.442695
    %v1383 = vpow.pop %v1382
    %v1384 = vmul.f32 %v1381, 1.442695
    %v1385 = vpow.pop %v1384
    %v1386 = vsel %vm213, %v1385, 0.0
    %v1387 = vadd.f32 %v1383, %v1386
    %v1388 = vrot.slane %v1387, 4
    %v1389 = vadd.f32 %v1387, %v1388
    %v1390 = vrot.slane %v1389, 2
    %v1391 = vadd.f32 %v1389, %v1390
    %v1392 = vrot.slane %v1391, 1
    %v1393 = vadd.f32 %v1391, %v1392
    %v1394 = vrcp.pop %v1393
    %v1395 = vmul.f32 %v1393, %v1394
    %v1396 = vsub.f32 1.0, %v1395
    %v1397 = vmul.f32 %v1394, %v1396
    %v1398 = vadd.f32 %v1394, %v1397
    %vm1399 = vweird.f32 %v1393
    %vm1400 = vweird.f32 %v1394
    %vm1401 = vmor %vm1399, %vm1400
    %v1402 = vsel %vm1401, %v1394, %v1398
    %v1403 = vand.u32 2147483647, %v1393
    %vm1404 = vcmp.eq.f32.partialorder %v1403, 8.507059e+37
    %v1405 = vand.u32 %v1393, 2147483648
    %v1406 = vor.u32 1.1754944e-38, %v1405
    %v1407 = vsel %vm1404, %v1406, %v1402
    %v1408 = vmul.f32 %v1383, %v1407
    %v1409 = vmul.f32 %v1385, %v1407
    %v1410 = vmul.f32 %v1306, %v1408
    %v1411 = vmul.f32 %v1307, %v1409
    %v1412 = vsel %vm291, %v1410, 0.0
    %vm1413 = vcmask 256000
    %v1414 = vsel %vm1413, %v1411, 0.0
    %v1415 = vadd.f32 %v1412, %v1414
    %v1416 = vrot.slane %v1415, 4
    %v1417 = vadd.f32 %v1415, %v1416
    %v1418 = vrot.slane %v1417, 2
    %v1419 = vadd.f32 %v1417, %v1418
    %v1420 = vrot.slane %v1419, 1
    %v1421 = vadd.f32 %v1419, %v1420
    %vm1422 = vcmask 1047555
    %v1423 = vsel %vm1422, %v1367, -inf
    %v1424 = vsel %vm1115, %v1371, -inf
    %v1425 = vmax.f32 %v1423, %v1424
    %v1426 = vrot.slane %v1425, 4
    %v1427 = vmax.f32 %v1425, %v1426
    %v1428 = vrot.slane %v1427, 2
    %v1429 = vmax.f32 %v1427, %v1428
    %v1430 = vrot.slane %v1429, 1
    %v1431 = vmax.f32 %v1429, %v1430
    %v1432 = vsub.f32 %v1367, %v1431
    %v1433 = vsub.f32 %v1371, %v1431
    %v1434 = vmul.f32 %v1432, 1.442695
    %v1435 = vpow.pop %v1434
    %v1436 = vmul.f32 %v1433, 1.442695
    %v1437 = vpow.pop %v1436
    %v1440 = vrot.slane %v1435, 3
    %v1441 = vrot.slane %v1437, 3
    %v1442 = vsel %vm1113, %v1440, %v1441
    %v1445 = vsel %vm213, %v1441, 0.0
    %v1446 = vadd.f32 %v1442, %v1445
    %v1447 = vrot.slane %v1446, 4
    %v1448 = vadd.f32 %v1446, %v1447
    %v1449 = vrot.slane %v1448, 2
    %v1450 = vadd.f32 %v1448, %v1449
    %v1451 = vrot.slane %v1450, 1
    %v1452 = vadd.f32 %v1450, %v1451
    %v1453 = vrcp.pop %v1452
    %v1454 = vmul.f32 %v1452, %v1453
    %v1455 = vsub.f32 1.0, %v1454
    %v1456 = vmul.f32 %v1453, %v1455
    %v1457 = vadd.f32 %v1453, %v1456
    %vm1458 = vweird.f32 %v1452
    %vm1459 = vweird.f32 %v1453
    %vm1460 = vmor %vm1458, %vm1459
    %v1461 = vsel %vm1460, %v1453, %v1457
    %v1462 = vand.u32 2147483647, %v1452
    %vm1463 = vcmp.eq.f32.partialorder %v1462, 8.507059e+37
    %v1464 = vand.u32 %v1452, 2147483648
    %v1465 = vor.u32 1.1754944e-38, %v1464
    %v1466 = vsel %vm1463, %v1465, %v1461
    %v1467 = vmul.f32 %v1435, %v1466
    %v1468 = vmul.f32 %v1437, %v1466
    %v1469 = vmul.f32 %v1307, %v1467
    %v1470 = vmul.f32 %v1308, %v1468
    %v1473 = vrot.slane %v1469, 3
    %v1474 = vrot.slane %v1470, 3
    %v1475 = vsel %vm1113, %v1473, %v1474
    %v1478 = vsel %vm291, %v1475, 0.0
    %v1479 = vsel %vm1413, %v1474, 0.0
    %v1480 = vadd.f32 %v1478, %v1479
    %v1481 = vrot.slane %v1480, 4
    %v1482 = vadd.f32 %v1480, %v1481
    %v1483 = vrot.slane %v1482, 2
    %v1484 = vadd.f32 %v1482, %v1483
    %v1485 = vrot.slane %v1484, 1
    %v1486 = vadd.f32 %v1484, %v1485
    %v1487 = vsel %vm335, %v1421, %v1486
    %v1488 = vld [vmem:[%s14] sm:$0xff]
    %v1489 = vld [vmem:[%s14 + $0x8] sm:$0xff]
    %v1490 = vld [vmem:[%s14 + $0x10] sm:$0xff]
    %v1491 = vld [vmem:[%s14 + $0x18] sm:$0xff]
    %v1492 = vld [vmem:[%s15] sm:$0x1]
    %v1494 = vperm.slane %v1492, 0
    %v1497 = vsel %vm291, %v1487, 0
    %1499 = vmatpush.msra.mxu0 0.0
    %1500 = vmatpush.msra.mxu0 0.0
    %1501 = vmatpush.msra.mxu0 0.0
    %1502 = vmatpush.msra.mxu0 0.0
    %1503 = vmatpush.msra.mxu0 0.0
    %1504 = vmatpush.msra.mxu0 0.0
    %1505 = vmatpush.msra.mxu0 0.0
    %1506 = vmatpush.msra.mxu0 0.0
    %1507 = vmatpush.msra.mxu0 0.0
    %1508 = vmatpush.msra.mxu0 0.0
    %1509 = vmatpush.msra.mxu0 0.0
    %1510 = vmatpush.msra.mxu0 0.0
    %1511 = vmatpush.msra.mxu0 %v1491
    %1512 = vmatpush.msra.mxu0 %v1490
    %1513 = vmatpush.msra.mxu0 %v1489
    %1514 = vmatpush.msra.mxu0 %v1488
    %1515 = vmatmul.f32.gmra.mxu0 %v1497
    %v1516 = vpop.f32.mrf.mxu0
    %v1517 = vadd.f32 %v1494, %v1516
    %1518 = vdwg.mxu0
    %vm1519 = vcmask 74752
    %1520 = vst.msk [vmem:[#allocation2] sm:$0x3] %vm1519, %v1517
    // Predicated region
    $region66: #{improved_phi_fc_forward.1} parent=1 // pred_check
      _
    $region67: #{improved_phi_fc_forward.1} parent=1 // pred_check_branch
      %1522 = sbr.rel (0) target = $region69
    $region68: #{improved_phi_fc_forward.1} parent=1 // pred_region
      %1524 = vsyncadd [#allocation3], 0
      %s1526 = sshll.u32 [#allocation2], 4
      %s1527 = int_to_ptr.vmem [resolvable:$true] %s1526
      %s1528 = sshll.u32 %s16, 4
      %s1529 = int_to_ptr.hbm [resolvable:$true] %s1528
      %1531 = dma.vmem_to_hbm [thread:$0]  %s1527, 32, %s1529, [#allocation3]
    $region69: #{improved_phi_fc_forward.1} parent=1 // pred_fallthru
      _
    // Predicated region
    $region70: #{improved_phi_fc_forward.1} parent=1 // pred_check
      _
    $region71: #{improved_phi_fc_forward.1} parent=1 // pred_check_branch
      %1533 = sbr.rel (0) target = $region73
    $region72: #{improved_phi_fc_forward.1} parent=1 // pred_region
      %1535 = dma.done [#allocation3], 32
    $region73: #{improved_phi_fc_forward.1} parent=1 // pred_fallthru
      _
    %1536 = vsyncpa [#allocation3], 1

</llo_original>
